<compile_context>
chip_gen: v6e
topology: v6e:2x2x1
jax: 0.10.0
libtpu: 0.0.40
codegen_flags: <defaults>
</compile_context>

<pallas_src>
import jax
import jax.numpy as jnp
import numpy as np
from jax.experimental import pallas as pl
from jax.experimental.pallas import tpu as pltpu

_EPS = 1e-5
_LANES = 128
_TILE_M_MAX = 2048                       # upper bound on the row tile
_TILE_BYTES_BUDGET = 24 * 1024 * 1024    # double-buffered per-step row slabs
_VMEM_LIMIT = 48 * 1024 * 1024           # fits v7x (64 MiB physical) with
                                         # headroom; ample spare on v5e/v6e.


def _round_up(x, m):
    return (x + m - 1) // m * m


def _pick_tile(m, kp, cp):
    """Row tile shared by every pass over this block's M rows.

    Largest power-of-two tile whose double-buffered bf16 LHS/y slabs (plus an
    f32 accumulator margin) fit the VMEM budget, while still giving >= 2 grid
    steps so both v7x TensorCores get work.
    """
    mp8 = _round_up(m, 8)
    per_row_bytes = 2 * 2 * (kp + cp) + 4 * cp
    tm = _TILE_M_MAX
    while tm > 8 and (tm * per_row_bytes > _TILE_BYTES_BUDGET or tm >= mp8):
        tm //= 2
    tm = max(tm, 8)
    mp = _round_up(mp8, tm)
    return tm, mp


def _pad_to(a, rows, cols, dtype=jnp.bfloat16):
    """Zero-pad a 2-D array to (rows, cols) in the given (bf16) dtype."""
    r, c = a.shape
    return jnp.pad(a.astype(dtype), ((0, rows - r), (0, cols - c)))


def _compiler_params():
    return pltpu.CompilerParams(dimension_semantics=("parallel",),
                                vmem_limit_bytes=_VMEM_LIMIT)


# ------------------------------ Pallas kernels -------------------------------

def _matmul_stats_kernel(x_ref, w_ref, y_ref, st_ref):
    """Phase 1: y = x @ w (bf16 operands, f32 MXU accumulation) + tile stats.

    y is stored in bf16; the (1, 2, cp) stats slab (row 0 = sum, row 1 =
    sum of squares) is computed from the f32 accumulator before the cast.
    """
    y = jnp.dot(x_ref[...], w_ref[...], preferred_element_type=jnp.float32)
    y_ref[...] = y.astype(y_ref.dtype)
    s = jnp.sum(y, axis=0, keepdims=True)
    q = jnp.sum(y * y, axis=0, keepdims=True)
    st_ref[...] = jnp.concatenate([s, q], axis=0)[None]


def _matmul_stats_only_kernel(x_ref, w_ref, st_ref):
    """Phase 1 (stats only): BN statistics of x @ w without writing y to HBM."""
    y = jnp.dot(x_ref[...], w_ref[...], preferred_element_type=jnp.float32)
    s = jnp.sum(y, axis=0, keepdims=True)
    q = jnp.sum(y * y, axis=0, keepdims=True)
    st_ref[...] = jnp.concatenate([s, q], axis=0)[None]


def _bn_relu_kernel(y_ref, scale_ref, shift_ref, out_ref):
    """Phase 2: out = relu(y * scale + shift)."""
    y = y_ref[...].astype(jnp.float32)
    out = y * scale_ref[...] + shift_ref[...]
    out_ref[...] = jnp.maximum(out, 0.0).astype(out_ref.dtype)


def _bn_add_relu_id_kernel(y_ref, res_ref, scale_ref, shift_ref, out_ref):
    """Phase 2 (identity shortcut): out = relu(y*scale + shift + res)."""
    out = y_ref[...].astype(jnp.float32) * scale_ref[...] + shift_ref[...]
    out = out + res_ref[...].astype(jnp.float32)
    out_ref[...] = jnp.maximum(out, 0.0).astype(out_ref.dtype)


def _bn_add_relu_ds_kernel(y_ref, xs_ref, wd_ref, scale_ref, shift_ref,
                           rscale_ref, rshift_ref, out_ref):
    """Phase 2 (downsample shortcut): recompute xs@wd on the MXU and fuse.

    out = relu(y*scale + shift + (xs @ wd)*rscale + rshift)
    """
    out = y_ref[...].astype(jnp.float32) * scale_ref[...] + shift_ref[...]
    res = jnp.dot(xs_ref[...], wd_ref[...], preferred_element_type=jnp.float32)
    out = out + res * rscale_ref[...] + rshift_ref[...]
    out_ref[...] = jnp.maximum(out, 0.0).astype(out_ref.dtype)


# ----------------------------- pallas_call glue -------------------------------

def _matmul_with_stats(lhs_p, w_p, tm, *, emit_y=True):
    """lhs_p[mp,kp] (bf16, padded) @ w_p[kp,cp] (bf16, padded).

    Returns (y bf16 [mp, cp] or None, ch_sum [1, cp] f32, ch_sumsq [1, cp] f32).
    Padded rows / columns are zeros, so the sums cover only real data.
    """
    mp, kp = lhs_p.shape
    cp = w_p.shape[1]
    n_tiles = mp // tm

    in_specs = [
        pl.BlockSpec((tm, kp), lambda i: (i, 0)),   # LHS tiled over M
        pl.BlockSpec((kp, cp), lambda i: (0, 0)),   # weights stay resident
    ]
    st_spec = pl.BlockSpec((1, 2, cp), lambda i: (i, 0, 0))

    if emit_y:
        y, stats = pl.pallas_call(
            _matmul_stats_kernel,
            out_shape=(jax.ShapeDtypeStruct((mp, cp), jnp.bfloat16),
                       jax.ShapeDtypeStruct((n_tiles, 2, cp), jnp.float32)),
            grid=(n_tiles,),
            in_specs=in_specs,
            out_specs=(pl.BlockSpec((tm, cp), lambda i: (i, 0)), st_spec),
            compiler_params=_compiler_params(),
        )(lhs_p, w_p)
    else:
        stats = pl.pallas_call(
            _matmul_stats_only_kernel,
            out_shape=jax.ShapeDtypeStruct((n_tiles, 2, cp), jnp.float32),
            grid=(n_tiles,),
            in_specs=in_specs,
            out_specs=st_spec,
            compiler_params=_compiler_params(),
        )(lhs_p, w_p)
        y = None

    ch_sum = jnp.sum(stats[:, 0, :], axis=0, keepdims=True)
    ch_sumsq = jnp.sum(stats[:, 1, :], axis=0, keepdims=True)
    return y, ch_sum, ch_sumsq


def _fold_bn(ch_sum, ch_sumsq, gamma, beta, count, cp):
    """Fold batch stats + gamma/beta into per-channel scale/shift (padded)."""
    count = jnp.float32(count)
    mean = ch_sum / count
    var = jnp.maximum(ch_sumsq / count - mean * mean, 0.0)   # one-pass, clamped
    inv = jax.lax.rsqrt(var + _EPS)
    c = gamma.shape[-1]
    g = jnp.pad(gamma.reshape(1, -1).astype(jnp.float32), ((0, 0), (0, cp - c)))
    b = jnp.pad(beta.reshape(1, -1).astype(jnp.float32), ((0, 0), (0, cp - c)))
    scale = g * inv
    shift = b - mean * scale
    return scale, shift


def _bn_relu(y, scale, shift, tm, out_dtype=jnp.bfloat16):
    mp, cp = y.shape
    n_tiles = mp // tm
    row = pl.BlockSpec((tm, cp), lambda i: (i, 0))
    vec = pl.BlockSpec((1, cp), lambda i: (0, 0))        # resident across grid
    return pl.pallas_call(
        _bn_relu_kernel,
        out_shape=jax.ShapeDtypeStruct((mp, cp), out_dtype),
        grid=(n_tiles,),
        in_specs=[row, vec, vec],
        out_specs=row,
        compiler_params=_compiler_params(),
    )(y, scale, shift)


def _bn_add_relu_identity(y, res, scale, shift, tm, out_dtype=jnp.float32):
    mp, cp = y.shape
    n_tiles = mp // tm
    row = pl.BlockSpec((tm, cp), lambda i: (i, 0))
    vec = pl.BlockSpec((1, cp), lambda i: (0, 0))
    return pl.pallas_call(
        _bn_add_relu_id_kernel,
        out_shape=jax.ShapeDtypeStruct((mp, cp), out_dtype),
        grid=(n_tiles,),
        in_specs=[row, row, vec, vec],
        out_specs=row,
        compiler_params=_compiler_params(),
    )(y, res, scale, shift)


def _bn_add_relu_downsample(y, xs_p, wd_p, scale, shift, rscale, rshift, tm,
                            out_dtype=jnp.float32):
    mp, cp = y.shape
    kd = xs_p.shape[1]
    n_tiles = mp // tm
    row_y = pl.BlockSpec((tm, cp), lambda i: (i, 0))
    row_x = pl.BlockSpec((tm, kd), lambda i: (i, 0))
    wspec = pl.BlockSpec((kd, cp), lambda i: (0, 0))     # resident 1x1 weights
    vec = pl.BlockSpec((1, cp), lambda i: (0, 0))
    return pl.pallas_call(
        _bn_add_relu_ds_kernel,
        out_shape=jax.ShapeDtypeStruct((mp, cp), out_dtype),
        grid=(n_tiles,),
        in_specs=[row_y, row_x, wspec, vec, vec, vec, vec],
        out_specs=row_y,
        compiler_params=_compiler_params(),
    )(y, xs_p, wd_p, scale, shift, rscale, rshift)


def _im2col(x_nhwc, ksize, stride, padding):
    """x: [N,H,W,C] -> patches [N*Ho*Wo, ksize*ksize*C] (order ky, kx, C).

    Built in the input's dtype (bf16 here), so the largest intermediate is
    half the size of an f32 patch matrix.
    """
    N, H, W, C = x_nhwc.shape
    xp = jnp.pad(x_nhwc, ((0, 0), (padding, padding), (padding, padding), (0, 0)))
    Ho = (H + 2 * padding - ksize) // stride + 1
    Wo = (W + 2 * padding - ksize) // stride + 1
    cols = []
    for ky in range(ksize):
        for kx in range(ksize):
            cols.append(xp[:, ky:ky + stride * (Ho - 1) + 1:stride,
                           kx:kx + stride * (Wo - 1) + 1:stride, :])
    patches = jnp.stack(cols, axis=3)                 # [N, Ho, Wo, k*k, C]
    return patches.reshape(N * Ho * Wo, ksize * ksize * C), Ho, Wo


# -------------------------------- BasicBlock ----------------------------------

def init_basic_block_params(key, inchannel, outchannel, stride):
    """Deterministic parameter init (HWIO conv weights, BN gamma/beta)."""
    ks = jax.random.split(key, 8)
    p = {
        # conv1: 3x3, stride=stride, pad=1, no bias
        "w1": 0.1 * jax.random.normal(ks[0], (3, 3, inchannel, outchannel), jnp.float32),
        "gamma1": 1.0 + 0.1 * jax.random.normal(ks[1], (1, outchannel), jnp.float32),
        "beta1": 0.1 * jax.random.normal(ks[2], (1, outchannel), jnp.float32),
        # conv2: 3x3, stride=1, pad=1, no bias
        "w2": 0.1 * jax.random.normal(ks[3], (3, 3, outchannel, outchannel), jnp.float32),
        "gamma2": 1.0 + 0.1 * jax.random.normal(ks[4], (1, outchannel), jnp.float32),
        "beta2": 0.1 * jax.random.normal(ks[5], (1, outchannel), jnp.float32),
    }
    if stride != 1 or inchannel != outchannel:
        p["wd"] = 0.1 * jax.random.normal(ks[6], (1, 1, inchannel, outchannel), jnp.float32)
        p["gammad"] = 1.0 + 0.1 * jax.random.normal(ks[7], (1, outchannel), jnp.float32)
        p["betad"] = jnp.zeros((1, outchannel), jnp.float32)
    return p


def basic_block_forward(x_nchw, params, stride):
    """Pallas implementation of BasicBlock.forward. Input/output are NCHW."""
    x = jnp.transpose(x_nchw, (0, 2, 3, 1)).astype(jnp.bfloat16)   # NHWC, bf16
    N, H, W, Cin = x.shape
    Cout = params["w1"].shape[-1]
    cp = _round_up(Cout, _LANES)

    # --- conv1 (3x3, stride) + bn1 + relu ------------------------------------
    p1, Ho, Wo = _im2col(x, 3, stride, 1)          # bf16 patches [M, 9*Cin]
    M = p1.shape[0]                                # N*Ho*Wo (conv2 shares M)
    kp1 = _round_up(9 * Cin, _LANES)
    kp2 = _round_up(9 * Cout, _LANES)
    kpd = _round_up(Cin, _LANES)
    tm, mp = _pick_tile(M, max(kp1, kp2), cp)      # shared row tile

    lhs1 = _pad_to(p1, mp, kp1)
    w1p = _pad_to(params["w1"].reshape(9 * Cin, Cout), kp1, cp)
    y1, s1, q1 = _matmul_with_stats(lhs1, w1p, tm)
    scale1, shift1 = _fold_bn(s1, q1, params["gamma1"], params["beta1"], M, cp)
    h1 = _bn_relu(y1, scale1, shift1, tm)                      # bf16 [mp, cp]
    h1 = h1[:M, :Cout].reshape(N, Ho, Wo, Cout)

    # --- conv2 (3x3, stride 1) + bn2 ----------------------------------------
    p2, _, _ = _im2col(h1, 3, 1, 1)                # bf16 patches [M, 9*Cout]
    lhs2 = _pad_to(p2, mp, kp2)
    w2p = _pad_to(params["w2"].reshape(9 * Cout, Cout), kp2, cp)
    y2, s2, q2 = _matmul_with_stats(lhs2, w2p, tm)
    scale2, shift2 = _fold_bn(s2, q2, params["gamma2"], params["beta2"], M, cp)

    # --- residual branch + fused add + relu ----------------------------------
    if "wd" in params:
        # Stats-only pass for the 1x1 conv BN; the conv itself is recomputed
        # inside the fused phase-2 kernel (no Mp x cp residual round trip).
        xs = x[:, ::stride, ::stride, :].reshape(M, Cin)
        xs_p = _pad_to(xs, mp, kpd)
        wd_p = _pad_to(params["wd"].reshape(Cin, Cout), kpd, cp)
        _, sd, qd = _matmul_with_stats(xs_p, wd_p, tm, emit_y=False)
        rscale, rshift = _fold_bn(sd, qd, params["gammad"], params["betad"], M, cp)
        out = _bn_add_relu_downsample(y2, xs_p, wd_p, scale2, shift2,
                                      rscale, rshift, tm)
    else:
        # Identity shortcut: pass bf16 x directly (single lane-pad, no f32
        # zero-fill copy, no dummy scale/shift multiplies).
        res_p = _pad_to(x.reshape(M, Cin), mp, cp)
        out = _bn_add_relu_identity(y2, res_p, scale2, shift2, tm)

    out = out[:M, :Cout].reshape(N, Ho, Wo, Cout)
    return jnp.transpose(out, (0, 3, 1, 2)).astype(jnp.float32)   # NCHW


# --------------------------- pure-JAX reference (check) -----------------------

def _ref_conv(x_nhwc, w_hwio, stride, padding):
    return jax.lax.conv_general_dilated(
        x_nhwc, w_hwio, window_strides=(stride, stride),
        padding=[(padding, padding), (padding, padding)],
        dimension_numbers=("NHWC", "HWIO", "NHWC"))


def _ref_bn(y, gamma, beta):
    mean = jnp.mean(y, axis=(0, 1, 2), keepdims=True)
    var = jnp.mean(jnp.square(y - mean), axis=(0, 1, 2), keepdims=True)
    return (y - mean) * jax.lax.rsqrt(var + _EPS) * gamma.reshape(1, 1, 1, -1) \
        + beta.reshape(1, 1, 1, -1)


def basic_block_reference(x_nchw, params, stride):
    x = jnp.transpose(x_nchw, (0, 2, 3, 1)).astype(jnp.float32)
    y = _ref_bn(_ref_conv(x, params["w1"], stride, 1), params["gamma1"], params["beta1"])
    y = jnp.maximum(y, 0.0)
    y = _ref_bn(_ref_conv(y, params["w2"], 1, 1), params["gamma2"], params["beta2"])
    if "wd" in params:
        res = _ref_bn(_ref_conv(x, params["wd"], stride, 0),
                      params["gammad"], params["betad"])
    else:
        res = x
    out = jnp.maximum(y + res, 0.0)
    return jnp.transpose(out, (0, 3, 1, 2))


# ------------------------------------ main -------------------------------------

if __name__ == "__main__":
    key = jax.random.PRNGKey(0)
    kx, kp1_, kp2_ = jax.random.split(key, 3)

    fwd = jax.jit(basic_block_forward, static_argnums=2)

    # Tolerance sized for bf16 MXU operands (f32 accumulation) vs f32 reference.
    RTOL = 5e-2
    ATOL = 5e-2

    # Case 1: downsample path (stride=2, channel change): x [2, 4, 16, 16]
    x = jax.random.normal(kx, (2, 4, 16, 16), jnp.float32)
    params1 = init_basic_block_params(kp1_, inchannel=4, outchannel=8, stride=2)
    out1 = jax.block_until_ready(fwd(x, params1, 2))
    ref1 = basic_block_reference(x, params1, 2)
    np.testing.assert_allclose(np.asarray(out1), np.asarray(ref1),
                               rtol=RTOL, atol=ATOL)

    # Case 2: identity shortcut (stride=1, same channels)
    params2 = init_basic_block_params(kp2_, inchannel=4, outchannel=4, stride=1)
    out2 = jax.block_until_ready(fwd(x, params2, 1))
    ref2 = basic_block_reference(x, params2, 1)
    np.testing.assert_allclose(np.asarray(out2), np.asarray(ref2),
                               rtol=RTOL, atol=ATOL)

    print("KERNEL_OK")
</pallas_src>

<mosaic_0001>
module attributes {stable_mosaic.version = 11 : i64} {
  func.func @_matmul_stats_kernel(%arg0: i32, %arg1: memref<64x128xbf16, #tpu.memory_space<vmem>>, %arg2: memref<128x128xbf16, #tpu.memory_space<vmem>>, %arg3: memref<64x128xbf16, #tpu.memory_space<vmem>>, %arg4: memref<1x2x128xf32, #tpu.memory_space<vmem>>) attributes {dimension_semantics = [#tpu.dimension_semantics<parallel>], iteration_bounds = array<i64: 2>, scalar_prefetch = 0 : i64, scratch_operands = 0 : i64, tpu.core_type = #tpu.core_type<tc>, window_params = [{transform_indices = @transform_0, window_bounds = array<i64: 64, 128>}, {pipeline_mode = #tpu.pipeline_mode<synchronous>, transform_indices = @transform_1, window_bounds = array<i64: 128, 128>}, {transform_indices = @transform_2, window_bounds = array<i64: 64, 128>}, {transform_indices = @transform_3, window_bounds = array<i64: 1, 2, 128>}]} {
    %c0 = arith.constant 0 : index
    %c0_0 = arith.constant 0 : index
    %0 = vector.load %arg1[%c0, %c0_0] : memref<64x128xbf16, #tpu.memory_space<vmem>>, vector<64x128xbf16>
    %c0_1 = arith.constant 0 : index
    %c0_2 = arith.constant 0 : index
    %1 = vector.load %arg2[%c0_1, %c0_2] : memref<128x128xbf16, #tpu.memory_space<vmem>>, vector<128x128xbf16>
    %cst = arith.constant dense<0.000000e+00> : vector<64x128xf32>
    %2 = tpu.matmul %0, %1, %cst {dimension_numbers = #tpu.dot_dimension_numbers<[1], [0], [0], [1], [0, 0, 1, 1], [], []>} : vector<64x128xbf16>, vector<128x128xbf16>, vector<64x128xf32> -> vector<64x128xf32>
    %3 = arith.truncf %2 : vector<64x128xf32> to vector<64x128xbf16>
    %c0_3 = arith.constant 0 : index
    %c0_4 = arith.constant 0 : index
    %4 = vector.load %arg3[%c0_3, %c0_4] : memref<64x128xbf16, #tpu.memory_space<vmem>>, vector<64x128xbf16>
    tpu.vector_store %arg3[%c0_3, %c0_4], %3 {strides = array<i32>} : memref<64x128xbf16, #tpu.memory_space<vmem>>, vector<64x128xbf16>,
    %cst_5 = arith.constant dense<0.000000e+00> : vector<128xf32>
    %5 = vector.multi_reduction <add>, %2, %cst_5 [0] : vector<64x128xf32> to vector<128xf32>
    %6 = vector.shape_cast %5 : vector<128xf32> to vector<1x128xf32>
    %7 = arith.mulf %2, %2 : vector<64x128xf32>
    %cst_6 = arith.constant dense<0.000000e+00> : vector<128xf32>
    %8 = vector.multi_reduction <add>, %7, %cst_6 [0] : vector<64x128xf32> to vector<128xf32>
    %9 = vector.shape_cast %8 : vector<128xf32> to vector<1x128xf32>
    %10 = tpu.concatenate %6, %9 in 0 : vector<1x128xf32>, vector<1x128xf32> -> vector<2x128xf32>
    %11 = vector.shape_cast %10 : vector<2x128xf32> to vector<1x2x128xf32>
    %c0_7 = arith.constant 0 : index
    %c0_8 = arith.constant 0 : index
    %c0_9 = arith.constant 0 : index
    %12 = vector.load %arg4[%c0_7, %c0_8, %c0_9] : memref<1x2x128xf32, #tpu.memory_space<vmem>>, vector<1x2x128xf32>
    tpu.vector_store %arg4[%c0_7, %c0_8, %c0_9], %11 {strides = array<i32>} : memref<1x2x128xf32, #tpu.memory_space<vmem>>, vector<1x2x128xf32>,
    return
  }
  func.func @transform_0(%arg0: i32) -> (i32, i32) {
    %c0_i32 = arith.constant 0 : i32
    %c0_i32_0 = arith.constant 0 : i32
    return %arg0, %c0_i32 : i32, i32
  }
  func.func @transform_1(%arg0: i32) -> (i32, i32) {
    %c0_i32 = arith.constant 0 : i32
    %c0_i32_0 = arith.constant 0 : i32
    %c0_i32_1 = arith.constant 0 : i32
    return %c0_i32, %c0_i32_0 : i32, i32
  }
  func.func @transform_2(%arg0: i32) -> (i32, i32) {
    %c0_i32 = arith.constant 0 : i32
    %c0_i32_0 = arith.constant 0 : i32
    return %arg0, %c0_i32 : i32, i32
  }
  func.func @transform_3(%arg0: i32) -> (i32, i32, i32) {
    %c0_i32 = arith.constant 0 : i32
    %c0_i32_0 = arith.constant 0 : i32
    %c0_i32_1 = arith.constant 0 : i32
    return %arg0, %c0_i32, %c0_i32_0 : i32, i32, i32
  }
}

module attributes {stable_mosaic.version = 11 : i64} {
  func.func @_bn_relu_kernel(%arg0: i32, %arg1: memref<64x128xbf16, #tpu.memory_space<vmem>>, %arg2: memref<1x128xf32, #tpu.memory_space<vmem>>, %arg3: memref<1x128xf32, #tpu.memory_space<vmem>>, %arg4: memref<64x128xbf16, #tpu.memory_space<vmem>>) attributes {dimension_semantics = [#tpu.dimension_semantics<parallel>], iteration_bounds = array<i64: 2>, scalar_prefetch = 0 : i64, scratch_operands = 0 : i64, tpu.core_type = #tpu.core_type<tc>, window_params = [{transform_indices = @transform_0, window_bounds = array<i64: 64, 128>}, {pipeline_mode = #tpu.pipeline_mode<synchronous>, transform_indices = @transform_1, window_bounds = array<i64: 1, 128>}, {pipeline_mode = #tpu.pipeline_mode<synchronous>, transform_indices = @transform_2, window_bounds = array<i64: 1, 128>}, {transform_indices = @transform_3, window_bounds = array<i64: 64, 128>}]} {
    %c0 = arith.constant 0 : index
    %c0_0 = arith.constant 0 : index
    %0 = vector.load %arg1[%c0, %c0_0] : memref<64x128xbf16, #tpu.memory_space<vmem>>, vector<64x128xbf16>
    %1 = arith.extf %0 : vector<64x128xbf16> to vector<64x128xf32>
    %c0_1 = arith.constant 0 : index
    %c0_2 = arith.constant 0 : index
    %2 = vector.load %arg2[%c0_1, %c0_2] : memref<1x128xf32, #tpu.memory_space<vmem>>, vector<1x128xf32>
    %3 = vector.broadcast %2 : vector<1x128xf32> to vector<64x128xf32>
    %4 = arith.mulf %1, %3 : vector<64x128xf32>
    %c0_3 = arith.constant 0 : index
    %c0_4 = arith.constant 0 : index
    %5 = vector.load %arg3[%c0_3, %c0_4] : memref<1x128xf32, #tpu.memory_space<vmem>>, vector<1x128xf32>
    %6 = vector.broadcast %5 : vector<1x128xf32> to vector<64x128xf32>
    %7 = arith.addf %4, %6 : vector<64x128xf32>
    %cst = arith.constant 0.000000e+00 : f32
    %8 = vector.broadcast %cst : f32 to vector<64x128xf32>
    %9 = arith.maximumf %7, %8 : vector<64x128xf32>
    %10 = arith.truncf %9 : vector<64x128xf32> to vector<64x128xbf16>
    %c0_5 = arith.constant 0 : index
    %c0_6 = arith.constant 0 : index
    %11 = vector.load %arg4[%c0_5, %c0_6] : memref<64x128xbf16, #tpu.memory_space<vmem>>, vector<64x128xbf16>
    tpu.vector_store %arg4[%c0_5, %c0_6], %10 {strides = array<i32>} : memref<64x128xbf16, #tpu.memory_space<vmem>>, vector<64x128xbf16>,
    return
  }
  func.func @transform_0(%arg0: i32) -> (i32, i32) {
    %c0_i32 = arith.constant 0 : i32
    %c0_i32_0 = arith.constant 0 : i32
    return %arg0, %c0_i32 : i32, i32
  }
  func.func @transform_1(%arg0: i32) -> (i32, i32) {
    %c0_i32 = arith.constant 0 : i32
    %c0_i32_0 = arith.constant 0 : i32
    %c0_i32_1 = arith.constant 0 : i32
    return %c0_i32, %c0_i32_0 : i32, i32
  }
  func.func @transform_2(%arg0: i32) -> (i32, i32) {
    %c0_i32 = arith.constant 0 : i32
    %c0_i32_0 = arith.constant 0 : i32
    %c0_i32_1 = arith.constant 0 : i32
    return %c0_i32, %c0_i32_0 : i32, i32
  }
  func.func @transform_3(%arg0: i32) -> (i32, i32) {
    %c0_i32 = arith.constant 0 : i32
    %c0_i32_0 = arith.constant 0 : i32
    return %arg0, %c0_i32 : i32, i32
  }
}

module attributes {stable_mosaic.version = 11 : i64} {
  func.func @_matmul_stats_only_kernel(%arg0: i32, %arg1: memref<64x128xbf16, #tpu.memory_space<vmem>>, %arg2: memref<128x128xbf16, #tpu.memory_space<vmem>>, %arg3: memref<1x2x128xf32, #tpu.memory_space<vmem>>) attributes {dimension_semantics = [#tpu.dimension_semantics<parallel>], iteration_bounds = array<i64: 2>, scalar_prefetch = 0 : i64, scratch_operands = 0 : i64, tpu.core_type = #tpu.core_type<tc>, window_params = [{transform_indices = @transform_0, window_bounds = array<i64: 64, 128>}, {pipeline_mode = #tpu.pipeline_mode<synchronous>, transform_indices = @transform_1, window_bounds = array<i64: 128, 128>}, {transform_indices = @transform_2, window_bounds = array<i64: 1, 2, 128>}]} {
    %c0 = arith.constant 0 : index
    %c0_0 = arith.constant 0 : index
    %0 = vector.load %arg1[%c0, %c0_0] : memref<64x128xbf16, #tpu.memory_space<vmem>>, vector<64x128xbf16>
    %c0_1 = arith.constant 0 : index
    %c0_2 = arith.constant 0 : index
    %1 = vector.load %arg2[%c0_1, %c0_2] : memref<128x128xbf16, #tpu.memory_space<vmem>>, vector<128x128xbf16>
    %cst = arith.constant dense<0.000000e+00> : vector<64x128xf32>
    %2 = tpu.matmul %0, %1, %cst {dimension_numbers = #tpu.dot_dimension_numbers<[1], [0], [0], [1], [0, 0, 1, 1], [], []>} : vector<64x128xbf16>, vector<128x128xbf16>, vector<64x128xf32> -> vector<64x128xf32>
    %cst_3 = arith.constant dense<0.000000e+00> : vector<128xf32>
    %3 = vector.multi_reduction <add>, %2, %cst_3 [0] : vector<64x128xf32> to vector<128xf32>
    %4 = vector.shape_cast %3 : vector<128xf32> to vector<1x128xf32>
    %5 = arith.mulf %2, %2 : vector<64x128xf32>
    %cst_4 = arith.constant dense<0.000000e+00> : vector<128xf32>
    %6 = vector.multi_reduction <add>, %5, %cst_4 [0] : vector<64x128xf32> to vector<128xf32>
    %7 = vector.shape_cast %6 : vector<128xf32> to vector<1x128xf32>
    %8 = tpu.concatenate %4, %7 in 0 : vector<1x128xf32>, vector<1x128xf32> -> vector<2x128xf32>
    %9 = vector.shape_cast %8 : vector<2x128xf32> to vector<1x2x128xf32>
    %c0_5 = arith.constant 0 : index
    %c0_6 = arith.constant 0 : index
    %c0_7 = arith.constant 0 : index
    %10 = vector.load %arg3[%c0_5, %c0_6, %c0_7] : memref<1x2x128xf32, #tpu.memory_space<vmem>>, vector<1x2x128xf32>
    tpu.vector_store %arg3[%c0_5, %c0_6, %c0_7], %9 {strides = array<i32>} : memref<1x2x128xf32, #tpu.memory_space<vmem>>, vector<1x2x128xf32>,
    return
  }
  func.func @transform_0(%arg0: i32) -> (i32, i32) {
    %c0_i32 = arith.constant 0 : i32
    %c0_i32_0 = arith.constant 0 : i32
    return %arg0, %c0_i32 : i32, i32
  }
  func.func @transform_1(%arg0: i32) -> (i32, i32) {
    %c0_i32 = arith.constant 0 : i32
    %c0_i32_0 = arith.constant 0 : i32
    %c0_i32_1 = arith.constant 0 : i32
    return %c0_i32, %c0_i32_0 : i32, i32
  }
  func.func @transform_2(%arg0: i32) -> (i32, i32, i32) {
    %c0_i32 = arith.constant 0 : i32
    %c0_i32_0 = arith.constant 0 : i32
    %c0_i32_1 = arith.constant 0 : i32
    return %arg0, %c0_i32, %c0_i32_0 : i32, i32, i32
  }
}

module attributes {stable_mosaic.version = 11 : i64} {
  func.func @_bn_add_relu_ds_kernel(%arg0: i32, %arg1: memref<64x128xbf16, #tpu.memory_space<vmem>>, %arg2: memref<64x128xbf16, #tpu.memory_space<vmem>>, %arg3: memref<128x128xbf16, #tpu.memory_space<vmem>>, %arg4: memref<1x128xf32, #tpu.memory_space<vmem>>, %arg5: memref<1x128xf32, #tpu.memory_space<vmem>>, %arg6: memref<1x128xf32, #tpu.memory_space<vmem>>, %arg7: memref<1x128xf32, #tpu.memory_space<vmem>>, %arg8: memref<64x128xf32, #tpu.memory_space<vmem>>) attributes {dimension_semantics = [#tpu.dimension_semantics<parallel>], iteration_bounds = array<i64: 2>, scalar_prefetch = 0 : i64, scratch_operands = 0 : i64, tpu.core_type = #tpu.core_type<tc>, window_params = [{transform_indices = @transform_0, window_bounds = array<i64: 64, 128>}, {transform_indices = @transform_1, window_bounds = array<i64: 64, 128>}, {pipeline_mode = #tpu.pipeline_mode<synchronous>, transform_indices = @transform_2, window_bounds = array<i64: 128, 128>}, {pipeline_mode = #tpu.pipeline_mode<synchronous>, transform_indices = @transform_3, window_bounds = array<i64: 1, 128>}, {pipeline_mode = #tpu.pipeline_mode<synchronous>, transform_indices = @transform_4, window_bounds = array<i64: 1, 128>}, {pipeline_mode = #tpu.pipeline_mode<synchronous>, transform_indices = @transform_5, window_bounds = array<i64: 1, 128>}, {pipeline_mode = #tpu.pipeline_mode<synchronous>, transform_indices = @transform_6, window_bounds = array<i64: 1, 128>}, {transform_indices = @transform_7, window_bounds = array<i64: 64, 128>}]} {
    %c0 = arith.constant 0 : index
    %c0_0 = arith.constant 0 : index
    %0 = vector.load %arg1[%c0, %c0_0] : memref<64x128xbf16, #tpu.memory_space<vmem>>, vector<64x128xbf16>
    %1 = arith.extf %0 : vector<64x128xbf16> to vector<64x128xf32>
    %c0_1 = arith.constant 0 : index
    %c0_2 = arith.constant 0 : index
    %2 = vector.load %arg4[%c0_1, %c0_2] : memref<1x128xf32, #tpu.memory_space<vmem>>, vector<1x128xf32>
    %3 = vector.broadcast %2 : vector<1x128xf32> to vector<64x128xf32>
    %4 = arith.mulf %1, %3 : vector<64x128xf32>
    %c0_3 = arith.constant 0 : index
    %c0_4 = arith.constant 0 : index
    %5 = vector.load %arg5[%c0_3, %c0_4] : memref<1x128xf32, #tpu.memory_space<vmem>>, vector<1x128xf32>
    %6 = vector.broadcast %5 : vector<1x128xf32> to vector<64x128xf32>
    %7 = arith.addf %4, %6 : vector<64x128xf32>
    %c0_5 = arith.constant 0 : index
    %c0_6 = arith.constant 0 : index
    %8 = vector.load %arg2[%c0_5, %c0_6] : memref<64x128xbf16, #tpu.memory_space<vmem>>, vector<64x128xbf16>
    %c0_7 = arith.constant 0 : index
    %c0_8 = arith.constant 0 : index
    %9 = vector.load %arg3[%c0_7, %c0_8] : memref<128x128xbf16, #tpu.memory_space<vmem>>, vector<128x128xbf16>
    %cst = arith.constant dense<0.000000e+00> : vector<64x128xf32>
    %10 = tpu.matmul %8, %9, %cst {dimension_numbers = #tpu.dot_dimension_numbers<[1], [0], [0], [1], [0, 0, 1, 1], [], []>} : vector<64x128xbf16>, vector<128x128xbf16>, vector<64x128xf32> -> vector<64x128xf32>
    %c0_9 = arith.constant 0 : index
    %c0_10 = arith.constant 0 : index
    %11 = vector.load %arg6[%c0_9, %c0_10] : memref<1x128xf32, #tpu.memory_space<vmem>>, vector<1x128xf32>
    %12 = vector.broadcast %11 : vector<1x128xf32> to vector<64x128xf32>
    %13 = arith.mulf %10, %12 : vector<64x128xf32>
    %14 = arith.addf %7, %13 : vector<64x128xf32>
    %c0_11 = arith.constant 0 : index
    %c0_12 = arith.constant 0 : index
    %15 = vector.load %arg7[%c0_11, %c0_12] : memref<1x128xf32, #tpu.memory_space<vmem>>, vector<1x128xf32>
    %16 = vector.broadcast %15 : vector<1x128xf32> to vector<64x128xf32>
    %17 = arith.addf %14, %16 : vector<64x128xf32>
    %cst_13 = arith.constant 0.000000e+00 : f32
    %18 = vector.broadcast %cst_13 : f32 to vector<64x128xf32>
    %19 = arith.maximumf %17, %18 : vector<64x128xf32>
    %c0_14 = arith.constant 0 : index
    %c0_15 = arith.constant 0 : index
    %20 = vector.load %arg8[%c0_14, %c0_15] : memref<64x128xf32, #tpu.memory_space<vmem>>, vector<64x128xf32>
    tpu.vector_store %arg8[%c0_14, %c0_15], %19 {strides = array<i32>} : memref<64x128xf32, #tpu.memory_space<vmem>>, vector<64x128xf32>,
    return
  }
  func.func @transform_0(%arg0: i32) -> (i32, i32) {
    %c0_i32 = arith.constant 0 : i32
    %c0_i32_0 = arith.constant 0 : i32
    return %arg0, %c0_i32 : i32, i32
  }
  func.func @transform_1(%arg0: i32) -> (i32, i32) {
    %c0_i32 = arith.constant 0 : i32
    %c0_i32_0 = arith.constant 0 : i32
    return %arg0, %c0_i32 : i32, i32
  }
  func.func @transform_2(%arg0: i32) -> (i32, i32) {
    %c0_i32 = arith.constant 0 : i32
    %c0_i32_0 = arith.constant 0 : i32
    %c0_i32_1 = arith.constant 0 : i32
    return %c0_i32, %c0_i32_0 : i32, i32
  }
  func.func @transform_3(%arg0: i32) -> (i32, i32) {
    %c0_i32 = arith.constant 0 : i32
    %c0_i32_0 = arith.constant 0 : i32
    %c0_i32_1 = arith.constant 0 : i32
    return %c0_i32, %c0_i32_0 : i32, i32
  }
  func.func @transform_4(%arg0: i32) -> (i32, i32) {
    %c0_i32 = arith.constant 0 : i32
    %c0_i32_0 = arith.constant 0 : i32
    %c0_i32_1 = arith.constant 0 : i32
    return %c0_i32, %c0_i32_0 : i32, i32
  }
  func.func @transform_5(%arg0: i32) -> (i32, i32) {
    %c0_i32 = arith.constant 0 : i32
    %c0_i32_0 = arith.constant 0 : i32
    %c0_i32_1 = arith.constant 0 : i32
    return %c0_i32, %c0_i32_0 : i32, i32
  }
  func.func @transform_6(%arg0: i32) -> (i32, i32) {
    %c0_i32 = arith.constant 0 : i32
    %c0_i32_0 = arith.constant 0 : i32
    %c0_i32_1 = arith.constant 0 : i32
    return %c0_i32, %c0_i32_0 : i32, i32
  }
  func.func @transform_7(%arg0: i32) -> (i32, i32) {
    %c0_i32 = arith.constant 0 : i32
    %c0_i32_0 = arith.constant 0 : i32
    return %arg0, %c0_i32 : i32, i32
  }
}

</mosaic_0001>

<llo_original>
// kernel: basic_block_forward.6
$region0: #{basic_block_forward.6}
  #allocation0 [shape = 'u32[]', space=smem, size = 0x4, offset = 0x4, fixed_abs, tag = 'smem constant byte address 0x4 - core index']
  #allocation1 [shape = 'u32[144,128]{1,0:T(1,128)}', space=vmem, size = 0x12000, scoped, tag = 'internal scratch']
  %s0 = inlined_call_operand.vmem [shape: bf16[128,128], index: 0, kind: input, shape index: {}]
  %s1 = inlined_call_operand.vmem [shape: f32[1,128], index: 1, kind: input, shape index: {}]
  %s2 = inlined_call_operand.vmem [shape: f32[1,128], index: 2, kind: input, shape index: {}]
  %s3 = inlined_call_operand.vmem [shape: bf16[128,128], index: 3, kind: output, shape index: {}]
  %s4 = sld [smem:[#allocation0]]
  $region45: #{basic_block_forward.6} parent=0
    _
  %s6 = ssub.s32 1, %s4
  %s7 = scalar_select 0, %s6, %s4
  loop: start=0, step=1, limit=4
  $region2: #{basic_block_forward.6} parent=0 // loop_pre_header
    _
  $region3: #{basic_block_forward.6} parent=0 // loop_header
    %s9 = sphi 0, %s13
    %p10 = scmp.ge.s32.totalorder %s9, 4
    %s19 = sphi 0, %s21
    %s22 = sphi 0, %s19
    %s23 = sphi 0, %s22
    %s39 = sphi 0, %s23
    %s43 = sphi 0, %s43
    %s45 = sphi 0, %s43
    %s46 = sphi 0, %s45
    %s60 = sphi 0, %s46
    %s64 = sphi 0, %s64
    %s66 = sphi 0, %s64
    %s67 = sphi 0, %s66
    %s81 = sphi 0, %s67
    %s87 = sphi 0, %s89
    %s90 = sphi 0, %s87
    %s91 = sphi 0, %s90
    %s107 = sphi 0, %s91
  $region4: #{basic_block_forward.6} parent=0 // loop_header_branch
    %12 = sbr.rel (%p10) target = $region8
  $region5: #{basic_block_forward.6} parent=0 // loop_body
    %s14 = ssub.s32 %s9, 1
    %s15 = ssub.s32 %s9, 2
    %s16 = sadd.s32 %s9, 1
    %s17 = ssub.s32 %s9, %s16
    %p18 = scmp.eq.s32.totalorder %s17, 0
    %s20 = sadd.s32 %s19, 1
    %s21 = scalar_select %p18, %s19, %s20
    %p24 = pneg %p18
    %p25 = scmp.eq.s32.totalorder %s9, 1
    %p26 = por %p24, %p25
    %p27 = scmp.ne.s32.totalorder %s19, %s22
    %p28 = scmp.eq.s32.totalorder %s9, 0
    %p29 = por %p27, %p28
    %p30 = scmp.ne.s32.totalorder %s19, %s22
    %p31 = scmp.eq.s32.totalorder %s14, 1
    %p32 = por %p30, %p31
    %p33 = scmp.ne.s32.totalorder %s22, %s23
    %p34 = scmp.eq.s32.totalorder %s14, 0
    %p35 = por %p33, %p34
    %p36 = scmp.ne.s32.totalorder %s22, %s23
    %p37 = scmp.eq.s32.totalorder %s15, 1
    %p38 = por %p36, %p37
    %p40 = scmp.ne.s32.totalorder %s23, %s39
    %p41 = scmp.eq.s32.totalorder %s15, 0
    %p42 = por %p40, %p41
    %s44 = sadd.s32 %s43, 1
    %p47 = scmp.eq.s32.totalorder %s9, 1
    %p48 = scmp.ne.s32.totalorder %s43, %s45
    %p49 = scmp.eq.s32.totalorder %s9, 0
    %p50 = por %p48, %p49
    %p51 = scmp.ne.s32.totalorder %s43, %s45
    %p52 = scmp.eq.s32.totalorder %s14, 1
    %p53 = por %p51, %p52
    %p54 = scmp.ne.s32.totalorder %s45, %s46
    %p55 = scmp.eq.s32.totalorder %s14, 0
    %p56 = por %p54, %p55
    %p57 = scmp.ne.s32.totalorder %s45, %s46
    %p58 = scmp.eq.s32.totalorder %s15, 1
    %p59 = por %p57, %p58
    %p61 = scmp.ne.s32.totalorder %s46, %s60
    %p62 = scmp.eq.s32.totalorder %s15, 0
    %p63 = por %p61, %p62
    %s65 = sadd.s32 %s64, 1
    %p68 = scmp.eq.s32.totalorder %s9, 1
    %p69 = scmp.ne.s32.totalorder %s64, %s66
    %p70 = scmp.eq.s32.totalorder %s9, 0
    %p71 = por %p69, %p70
    %p72 = scmp.ne.s32.totalorder %s64, %s66
    %p73 = scmp.eq.s32.totalorder %s14, 1
    %p74 = por %p72, %p73
    %p75 = scmp.ne.s32.totalorder %s66, %s67
    %p76 = scmp.eq.s32.totalorder %s14, 0
    %p77 = por %p75, %p76
    %p78 = scmp.ne.s32.totalorder %s66, %s67
    %p79 = scmp.eq.s32.totalorder %s15, 1
    %p80 = por %p78, %p79
    %p82 = scmp.ne.s32.totalorder %s67, %s81
    %p83 = scmp.eq.s32.totalorder %s15, 0
    %p84 = por %p82, %p83
    %s85 = ssub.s32 %s9, %s16
    %p86 = scmp.eq.s32.totalorder %s85, 0
    %s88 = sadd.s32 %s87, 1
    %s89 = scalar_select %p86, %s87, %s88
    %p92 = pneg %p86
    %p93 = scmp.eq.s32.totalorder %s9, 1
    %p94 = por %p92, %p93
    %p95 = scmp.ne.s32.totalorder %s87, %s90
    %p96 = scmp.eq.s32.totalorder %s9, 0
    %p97 = por %p95, %p96
    %p98 = scmp.ne.s32.totalorder %s87, %s90
    %p99 = scmp.eq.s32.totalorder %s14, 1
    %p100 = por %p98, %p99
    %p101 = scmp.ne.s32.totalorder %s90, %s91
    %p102 = scmp.eq.s32.totalorder %s14, 0
    %p103 = por %p101, %p102
    %p104 = scmp.ne.s32.totalorder %s90, %s91
    %p105 = scmp.eq.s32.totalorder %s15, 1
    %p106 = por %p104, %p105
    %p108 = scmp.ne.s32.totalorder %s91, %s107
    %p109 = scmp.eq.s32.totalorder %s15, 0
    %p110 = por %p108, %p109
    %p111 = scmp.le.s32.totalorder 1, %s9
    %p112 = scmp.lt.s32.totalorder %s9, 3
    %p113 = pnand %p111, %p112
    %p114 = pneg %p113
    // Predicated region
    $region9: #{basic_block_forward.6} parent=5 // pred_check
      _
    $region10: #{basic_block_forward.6} parent=5 // pred_check_branch
      %116 = sbr.rel (%p113) target = $region12
    $region11: #{basic_block_forward.6} parent=5 // pred_region
      %s117 = ssub.s32 %s9, 1
      // Predicated region
      $region13: #{basic_block_forward.6} parent=11 // pred_check
        %p118 = pneg %p56
      $region14: #{basic_block_forward.6} parent=11 // pred_check_branch
        %120 = sbr.rel (%p118) target = $region16
      $region15: #{basic_block_forward.6} parent=11 // pred_region
        _
      $region16: #{basic_block_forward.6} parent=11 // pred_fallthru
        _
      // Predicated region
      $region17: #{basic_block_forward.6} parent=11 // pred_check
        %p121 = pneg %p77
      $region18: #{basic_block_forward.6} parent=11 // pred_check_branch
        %123 = sbr.rel (%p121) target = $region20
      $region19: #{basic_block_forward.6} parent=11 // pred_region
        _
      $region20: #{basic_block_forward.6} parent=11 // pred_fallthru
        _
    $region12: #{basic_block_forward.6} parent=5 // pred_fallthru
      _
    %p124 = scmp.lt.s32.totalorder %s9, 2
    // Predicated region
    $region21: #{basic_block_forward.6} parent=5 // pred_check
      %p125 = pneg %p124
    $region22: #{basic_block_forward.6} parent=5 // pred_check_branch
      %127 = sbr.rel (%p125) target = $region24
    $region23: #{basic_block_forward.6} parent=5 // pred_region
      // Predicated region
      $region25: #{basic_block_forward.6} parent=23 // pred_check
        %p128 = pneg %p29
      $region26: #{basic_block_forward.6} parent=23 // pred_check_branch
        %130 = sbr.rel (%p128) target = $region28
      $region27: #{basic_block_forward.6} parent=23 // pred_region
        %s131 = smul.u32 8, %s9
        %p132 = scmp.lt.s32.totalorder %s131, 15
        %s133 = scalar_select %p132, %s131, 15
        %s134 = smul.addr %s133, 4
        %s135 = scalar_lea.vmem %s0, %s134
        %s136 = smul.u32 8, %s9
      $region28: #{basic_block_forward.6} parent=23 // pred_fallthru
        _
    $region24: #{basic_block_forward.6} parent=5 // pred_fallthru
      _
    %p137 = scmp.le.s32.totalorder 1, %s9
    %p138 = scmp.lt.s32.totalorder %s9, 3
    %p139 = pnand %p137, %p138
    %p140 = pneg %p139
    // Predicated region
    $region29: #{basic_block_forward.6} parent=5 // pred_check
      _
    $region30: #{basic_block_forward.6} parent=5 // pred_check_branch
      %142 = sbr.rel (%p139) target = $region32
    $region31: #{basic_block_forward.6} parent=5 // pred_region
      %s143 = ssub.s32 %s9, 1
      %s144 = smul.u32 8, %s14
      %p145 = scmp.lt.s32.totalorder %s144, 15
      %s146 = scalar_select %p145, %s144, 15
      %s147 = smul.addr %s146, 4
      %s148 = scalar_lea.vmem %s0, %s147
      %p149 = pneg %p35
      %p150 = pneg %p32
      %p151 = pneg %p56
      %p152 = pneg %p53
      %p153 = pneg %p77
      %p154 = pneg %p74
      %p155 = pneg %p103
      %p156 = pneg %p100
      %s157 = smul.u32 8, %s14
      %p158 = scmp.lt.s32.totalorder %s157, 15
      %s159 = scalar_select %p158, %s157, 15
      %s160 = smul.addr %s159, 4
      %s161 = scalar_lea.vmem %s3, %s160
      %s162 = smul.u32 8, %s14
      %p163 = scmp.lt.s32.totalorder %s162, 15
      %s164 = scalar_select %p163, %s162, 15
      %s165 = smul.addr %s164, 4
      %s166 = scalar_lea.vmem %s0, %s165
      %s167 = smul.u32 8, %s14
      %s168 = smul.u32 8, %s14
      %p169 = scmp.lt.s32.totalorder %s168, 15
      %s170 = scalar_select %p169, %s168, 15
      %s171 = smul.addr %s170, 4
      %s172 = scalar_lea.vmem %s3, %s171
      %s173 = smul.u32 8, %s14
      %v174 = vld [vmem:[%s166] sm:$0xf]
      %v175 = vld [vmem:[%s166 + $0x4] sm:$0xf]
      %v176 = vld [vmem:[%s166 + $0x8] sm:$0xf]
      %v177 = vld [vmem:[%s166 + $0xc] sm:$0xf]
      %v178 = vld [vmem:[%s166 + $0x10] sm:$0xf]
      %v179 = vld [vmem:[%s166 + $0x14] sm:$0xf]
      %v180 = vld [vmem:[%s166 + $0x18] sm:$0xf]
      %v181 = vld [vmem:[%s166 + $0x1c] sm:$0xf]
      %v182 = vunpack.c.l.bf16 %v174
      %v183 = vunpack.c.l.bf16 %v175
      %v184 = vunpack.c.l.bf16 %v176
      %v185 = vunpack.c.l.bf16 %v177
      %v186 = vunpack.c.l.bf16 %v178
      %v187 = vunpack.c.l.bf16 %v179
      %v188 = vunpack.c.l.bf16 %v180
      %v189 = vunpack.c.l.bf16 %v181
      %v190 = vld [vmem:[%s1] sm:$0x1]
      %v192 = vlaneseq
      %v193 = vshrl.u32 %v192, 7
      %v194 = vsub.s32 0, %v193
      %v195 = vrot.slane %v190, %v194
      %v197 = vmul.f32 %v182, %v195
      %v198 = vmul.f32 %v183, %v195
      %v199 = vmul.f32 %v184, %v195
      %v200 = vmul.f32 %v185, %v195
      %v201 = vmul.f32 %v186, %v195
      %v202 = vmul.f32 %v187, %v195
      %v203 = vmul.f32 %v188, %v195
      %v204 = vmul.f32 %v189, %v195
      %v205 = vld [vmem:[%s2] sm:$0x1]
      %v207 = vlaneseq
      %v208 = vshrl.u32 %v207, 7
      %v209 = vsub.s32 0, %v208
      %v210 = vrot.slane %v205, %v209
      %v212 = vadd.f32 %v197, %v210
      %v213 = vadd.f32 %v198, %v210
      %v214 = vadd.f32 %v199, %v210
      %v215 = vadd.f32 %v200, %v210
      %v216 = vadd.f32 %v201, %v210
      %v217 = vadd.f32 %v202, %v210
      %v218 = vadd.f32 %v203, %v210
      %v219 = vadd.f32 %v204, %v210
      %v220 = vmax.f32 %v212, 0.0
      %v221 = vmax.f32 %v213, 0.0
      %v222 = vmax.f32 %v214, 0.0
      %v223 = vmax.f32 %v215, 0.0
      %v224 = vmax.f32 %v216, 0.0
      %v225 = vmax.f32 %v217, 0.0
      %v226 = vmax.f32 %v218, 0.0
      %v227 = vmax.f32 %v219, 0.0
      %v228 = vpack.c.bf16 %v221, %v220
      %v229 = vpack.c.bf16 %v223, %v222
      %v230 = vpack.c.bf16 %v225, %v224
      %v231 = vpack.c.bf16 %v227, %v226
      %v236 = vunpack.c.l.b16 %v228
      %v237 = vunpack.c.h.b16 %v228
      %v238 = vunpack.c.l.b16 %v229
      %v239 = vunpack.c.h.b16 %v229
      %v240 = vunpack.c.l.b16 %v230
      %v241 = vunpack.c.h.b16 %v230
      %v242 = vunpack.c.l.b16 %v231
      %v243 = vunpack.c.h.b16 %v231
      %v244 = vpack.c.b16 %v236, %v236
      %v245 = vpack.c.b16 %v237, %v237
      %v246 = vpack.c.b16 %v238, %v238
      %v247 = vpack.c.b16 %v239, %v239
      %v248 = vpack.c.b16 %v240, %v240
      %v249 = vpack.c.b16 %v241, %v241
      %v250 = vpack.c.b16 %v242, %v242
      %v251 = vpack.c.b16 %v243, %v243
      %260 = vst [vmem:[%s172] sm:$0xf] %v244
      %261 = vst [vmem:[%s172 + $0x4] sm:$0xf] %v245
      %262 = vst [vmem:[%s172 + $0x8] sm:$0xf] %v246
      %263 = vst [vmem:[%s172 + $0xc] sm:$0xf] %v247
      %264 = vst [vmem:[%s172 + $0x10] sm:$0xf] %v248
      %265 = vst [vmem:[%s172 + $0x14] sm:$0xf] %v249
      %266 = vst [vmem:[%s172 + $0x18] sm:$0xf] %v250
      %267 = vst [vmem:[%s172 + $0x1c] sm:$0xf] %v251
      %s268 = smul.u32 8, %s14
      %p269 = scmp.lt.s32.totalorder %s268, 15
      %s270 = scalar_select %p269, %s268, 15
      %s271 = smul.addr %s270, 4
      %s272 = scalar_lea.vmem %s3, %s271
      // Predicated region
      $region33: #{basic_block_forward.6} parent=31 // pred_check
        %p273 = pneg %p100
      $region34: #{basic_block_forward.6} parent=31 // pred_check_branch
        %275 = sbr.rel (%p273) target = $region36
      $region35: #{basic_block_forward.6} parent=31 // pred_region
        %s276 = smul.u32 8, %s14
      $region36: #{basic_block_forward.6} parent=31 // pred_fallthru
        _
    $region32: #{basic_block_forward.6} parent=5 // pred_fallthru
      _
    %p277 = scmp.le.s32.totalorder 2, %s9
    // Predicated region
    $region37: #{basic_block_forward.6} parent=5 // pred_check
      %p278 = pneg %p277
    $region38: #{basic_block_forward.6} parent=5 // pred_check_branch
      %280 = sbr.rel (%p278) target = $region40
    $region39: #{basic_block_forward.6} parent=5 // pred_region
      %s281 = ssub.s32 %s9, 2
      // Predicated region
      $region41: #{basic_block_forward.6} parent=39 // pred_check
        %p282 = pneg %p106
      $region42: #{basic_block_forward.6} parent=39 // pred_check_branch
        %284 = sbr.rel (%p282) target = $region44
      $region43: #{basic_block_forward.6} parent=39 // pred_region
        %s285 = smul.u32 8, %s15
        %p286 = scmp.lt.s32.totalorder %s285, 15
        %s287 = scalar_select %p286, %s285, 15
        %s288 = smul.addr %s287, 4
        %s289 = scalar_lea.vmem %s3, %s288
      $region44: #{basic_block_forward.6} parent=39 // pred_fallthru
        _
    $region40: #{basic_block_forward.6} parent=5 // pred_fallthru
      _
  $region6: #{basic_block_forward.6} parent=0 // loop_footer
    %s13 = sadd.s32 1, %s9
  $region7: #{basic_block_forward.6} parent=0 // loop_footer_branch
    %8 = sbr.rel target = $region3
  $region8: #{basic_block_forward.6} parent=0 // loop_exit
    _

// kernel: basic_block_forward.5
$region0: #{basic_block_forward.5}
  #allocation0 [shape = 'u32[]', space=smem, size = 0x4, offset = 0x4, fixed_abs, tag = 'smem constant byte address 0x4 - core index']
  #allocation1 [shape = 'u32[144,128]{1,0:T(1,128)}', space=vmem, size = 0x12000, scoped, tag = 'internal scratch']
  %s0 = inlined_call_operand.vmem [shape: bf16[128,128], index: 0, kind: input, shape index: {}]
  %s1 = inlined_call_operand.vmem [shape: bf16[128,128], index: 1, kind: input, shape index: {}]
  %s2 = inlined_call_operand.vmem [shape: bf16[128,128], index: 2, kind: output, shape index: {0}]
  %s3 = inlined_call_operand.vmem [shape: f32[2,2,128], index: 3, kind: output, shape index: {1}]
  %4 = xla_tuple %s2, %s3
  %s5 = sld [smem:[#allocation0]]
  $region49: #{basic_block_forward.5} parent=0
    _
  %s7 = ssub.s32 1, %s5
  %s8 = scalar_select 0, %s7, %s5
  loop: start=0, step=1, limit=4
  $region2: #{basic_block_forward.5} parent=0 // loop_pre_header
    _
  $region3: #{basic_block_forward.5} parent=0 // loop_header
    %s10 = sphi 0, %s14
    %p11 = scmp.ge.s32.totalorder %s10, 4
    %s20 = sphi 0, %s22
    %s23 = sphi 0, %s20
    %s24 = sphi 0, %s23
    %s40 = sphi 0, %s24
    %s44 = sphi 0, %s44
    %s46 = sphi 0, %s44
    %s47 = sphi 0, %s46
    %s61 = sphi 0, %s47
    %s67 = sphi 0, %s69
    %s70 = sphi 0, %s67
    %s71 = sphi 0, %s70
    %s87 = sphi 0, %s71
    %s93 = sphi 0, %s95
    %s96 = sphi 0, %s93
    %s97 = sphi 0, %s96
    %s113 = sphi 0, %s97
  $region4: #{basic_block_forward.5} parent=0 // loop_header_branch
    %13 = sbr.rel (%p11) target = $region8
  $region5: #{basic_block_forward.5} parent=0 // loop_body
    %s15 = ssub.s32 %s10, 1
    %s16 = ssub.s32 %s10, 2
    %s17 = sadd.s32 %s10, 1
    %s18 = ssub.s32 %s10, %s17
    %p19 = scmp.eq.s32.totalorder %s18, 0
    %s21 = sadd.s32 %s20, 1
    %s22 = scalar_select %p19, %s20, %s21
    %p25 = pneg %p19
    %p26 = scmp.eq.s32.totalorder %s10, 1
    %p27 = por %p25, %p26
    %p28 = scmp.ne.s32.totalorder %s20, %s23
    %p29 = scmp.eq.s32.totalorder %s10, 0
    %p30 = por %p28, %p29
    %p31 = scmp.ne.s32.totalorder %s20, %s23
    %p32 = scmp.eq.s32.totalorder %s15, 1
    %p33 = por %p31, %p32
    %p34 = scmp.ne.s32.totalorder %s23, %s24
    %p35 = scmp.eq.s32.totalorder %s15, 0
    %p36 = por %p34, %p35
    %p37 = scmp.ne.s32.totalorder %s23, %s24
    %p38 = scmp.eq.s32.totalorder %s16, 1
    %p39 = por %p37, %p38
    %p41 = scmp.ne.s32.totalorder %s24, %s40
    %p42 = scmp.eq.s32.totalorder %s16, 0
    %p43 = por %p41, %p42
    %s45 = sadd.s32 %s44, 1
    %p48 = scmp.eq.s32.totalorder %s10, 1
    %p49 = scmp.ne.s32.totalorder %s44, %s46
    %p50 = scmp.eq.s32.totalorder %s10, 0
    %p51 = por %p49, %p50
    %p52 = scmp.ne.s32.totalorder %s44, %s46
    %p53 = scmp.eq.s32.totalorder %s15, 1
    %p54 = por %p52, %p53
    %p55 = scmp.ne.s32.totalorder %s46, %s47
    %p56 = scmp.eq.s32.totalorder %s15, 0
    %p57 = por %p55, %p56
    %p58 = scmp.ne.s32.totalorder %s46, %s47
    %p59 = scmp.eq.s32.totalorder %s16, 1
    %p60 = por %p58, %p59
    %p62 = scmp.ne.s32.totalorder %s47, %s61
    %p63 = scmp.eq.s32.totalorder %s16, 0
    %p64 = por %p62, %p63
    %s65 = ssub.s32 %s10, %s17
    %p66 = scmp.eq.s32.totalorder %s65, 0
    %s68 = sadd.s32 %s67, 1
    %s69 = scalar_select %p66, %s67, %s68
    %p72 = pneg %p66
    %p73 = scmp.eq.s32.totalorder %s10, 1
    %p74 = por %p72, %p73
    %p75 = scmp.ne.s32.totalorder %s67, %s70
    %p76 = scmp.eq.s32.totalorder %s10, 0
    %p77 = por %p75, %p76
    %p78 = scmp.ne.s32.totalorder %s67, %s70
    %p79 = scmp.eq.s32.totalorder %s15, 1
    %p80 = por %p78, %p79
    %p81 = scmp.ne.s32.totalorder %s70, %s71
    %p82 = scmp.eq.s32.totalorder %s15, 0
    %p83 = por %p81, %p82
    %p84 = scmp.ne.s32.totalorder %s70, %s71
    %p85 = scmp.eq.s32.totalorder %s16, 1
    %p86 = por %p84, %p85
    %p88 = scmp.ne.s32.totalorder %s71, %s87
    %p89 = scmp.eq.s32.totalorder %s16, 0
    %p90 = por %p88, %p89
    %s91 = ssub.s32 %s10, %s17
    %p92 = scmp.eq.s32.totalorder %s91, 0
    %s94 = sadd.s32 %s93, 1
    %s95 = scalar_select %p92, %s93, %s94
    %p98 = pneg %p92
    %p99 = scmp.eq.s32.totalorder %s10, 1
    %p100 = por %p98, %p99
    %p101 = scmp.ne.s32.totalorder %s93, %s96
    %p102 = scmp.eq.s32.totalorder %s10, 0
    %p103 = por %p101, %p102
    %p104 = scmp.ne.s32.totalorder %s93, %s96
    %p105 = scmp.eq.s32.totalorder %s15, 1
    %p106 = por %p104, %p105
    %p107 = scmp.ne.s32.totalorder %s96, %s97
    %p108 = scmp.eq.s32.totalorder %s15, 0
    %p109 = por %p107, %p108
    %p110 = scmp.ne.s32.totalorder %s96, %s97
    %p111 = scmp.eq.s32.totalorder %s16, 1
    %p112 = por %p110, %p111
    %p114 = scmp.ne.s32.totalorder %s97, %s113
    %p115 = scmp.eq.s32.totalorder %s16, 0
    %p116 = por %p114, %p115
    %p117 = scmp.le.s32.totalorder 1, %s10
    %p118 = scmp.lt.s32.totalorder %s10, 3
    %p119 = pnand %p117, %p118
    %p120 = pneg %p119
    // Predicated region
    $region9: #{basic_block_forward.5} parent=5 // pred_check
      _
    $region10: #{basic_block_forward.5} parent=5 // pred_check_branch
      %122 = sbr.rel (%p119) target = $region12
    $region11: #{basic_block_forward.5} parent=5 // pred_region
      %s123 = ssub.s32 %s10, 1
      // Predicated region
      $region13: #{basic_block_forward.5} parent=11 // pred_check
        %p124 = pneg %p57
      $region14: #{basic_block_forward.5} parent=11 // pred_check_branch
        %126 = sbr.rel (%p124) target = $region16
      $region15: #{basic_block_forward.5} parent=11 // pred_region
        _
      $region16: #{basic_block_forward.5} parent=11 // pred_fallthru
        _
    $region12: #{basic_block_forward.5} parent=5 // pred_fallthru
      _
    %p127 = scmp.lt.s32.totalorder %s10, 2
    // Predicated region
    $region17: #{basic_block_forward.5} parent=5 // pred_check
      %p128 = pneg %p127
    $region18: #{basic_block_forward.5} parent=5 // pred_check_branch
      %130 = sbr.rel (%p128) target = $region20
    $region19: #{basic_block_forward.5} parent=5 // pred_region
      // Predicated region
      $region21: #{basic_block_forward.5} parent=19 // pred_check
        %p131 = pneg %p30
      $region22: #{basic_block_forward.5} parent=19 // pred_check_branch
        %133 = sbr.rel (%p131) target = $region24
      $region23: #{basic_block_forward.5} parent=19 // pred_region
        %s134 = smul.u32 8, %s10
        %p135 = scmp.lt.s32.totalorder %s134, 15
        %s136 = scalar_select %p135, %s134, 15
        %s137 = smul.addr %s136, 4
        %s138 = scalar_lea.vmem %s0, %s137
        %s139 = smul.u32 8, %s10
      $region24: #{basic_block_forward.5} parent=19 // pred_fallthru
        _
    $region20: #{basic_block_forward.5} parent=5 // pred_fallthru
      _
    %p140 = scmp.le.s32.totalorder 1, %s10
    %p141 = scmp.lt.s32.totalorder %s10, 3
    %p142 = pnand %p140, %p141
    %p143 = pneg %p142
    // Predicated region
    $region25: #{basic_block_forward.5} parent=5 // pred_check
      _
    $region26: #{basic_block_forward.5} parent=5 // pred_check_branch
      %145 = sbr.rel (%p142) target = $region28
    $region27: #{basic_block_forward.5} parent=5 // pred_region
      %s146 = ssub.s32 %s10, 1
      %s147 = smul.u32 8, %s15
      %p148 = scmp.lt.s32.totalorder %s147, 15
      %s149 = scalar_select %p148, %s147, 15
      %s150 = smul.addr %s149, 4
      %s151 = scalar_lea.vmem %s0, %s150
      %p152 = pneg %p36
      %p153 = pneg %p33
      %p154 = pneg %p57
      %p155 = pneg %p54
      %p156 = pneg %p83
      %p157 = pneg %p80
      %s158 = smul.u32 8, %s15
      %p159 = scmp.lt.s32.totalorder %s158, 15
      %s160 = scalar_select %p159, %s158, 15
      %s161 = smul.addr %s160, 4
      %s162 = scalar_lea.vmem %s2, %s161
      %p163 = pneg %p109
      %p164 = pneg %p106
      %p165 = scmp.lt.s32.totalorder %s15, 1
      %s166 = scalar_select %p165, %s15, 1
      %s167 = smul.addr %s166, 2
      %s168 = scalar_lea.vmem %s3, %s167
      %s169 = smul.u32 8, %s15
      %p170 = scmp.lt.s32.totalorder %s169, 15
      %s171 = scalar_select %p170, %s169, 15
      %s172 = smul.addr %s171, 4
      %s173 = scalar_lea.vmem %s0, %s172
      %s174 = smul.u32 8, %s15
      %s175 = smul.u32 8, %s15
      %p176 = scmp.lt.s32.totalorder %s175, 15
      %s177 = scalar_select %p176, %s175, 15
      %s178 = smul.addr %s177, 4
      %s179 = scalar_lea.vmem %s2, %s178
      %s180 = smul.u32 8, %s15
      %p181 = scmp.lt.s32.totalorder %s15, 1
      %s182 = scalar_select %p181, %s15, 1
      %s183 = smul.addr %s182, 2
      %s184 = scalar_lea.vmem %s3, %s183
      %v186 = vld [vmem:[%s173] sm:$0xf]
      %v187 = vld [vmem:[%s173 + $0x4] sm:$0xf]
      %v188 = vld [vmem:[%s173 + $0x8] sm:$0xf]
      %v189 = vld [vmem:[%s173 + $0xc] sm:$0xf]
      %v190 = vld [vmem:[%s173 + $0x10] sm:$0xf]
      %v191 = vld [vmem:[%s173 + $0x14] sm:$0xf]
      %v192 = vld [vmem:[%s173 + $0x18] sm:$0xf]
      %v193 = vld [vmem:[%s173 + $0x1c] sm:$0xf]
      %v194 = vld [vmem:[%s1] sm:$0xf]
      %v195 = vld [vmem:[%s1 + $0x4] sm:$0xf]
      %v196 = vld [vmem:[%s1 + $0x8] sm:$0xf]
      %v197 = vld [vmem:[%s1 + $0xc] sm:$0xf]
      %v198 = vld [vmem:[%s1 + $0x10] sm:$0xf]
      %v199 = vld [vmem:[%s1 + $0x14] sm:$0xf]
      %v200 = vld [vmem:[%s1 + $0x18] sm:$0xf]
      %v201 = vld [vmem:[%s1 + $0x1c] sm:$0xf]
      %v202 = vld [vmem:[%s1 + $0x20] sm:$0xf]
      %v203 = vld [vmem:[%s1 + $0x24] sm:$0xf]
      %v204 = vld [vmem:[%s1 + $0x28] sm:$0xf]
      %v205 = vld [vmem:[%s1 + $0x2c] sm:$0xf]
      %v206 = vld [vmem:[%s1 + $0x30] sm:$0xf]
      %v207 = vld [vmem:[%s1 + $0x34] sm:$0xf]
      %v208 = vld [vmem:[%s1 + $0x38] sm:$0xf]
      %v209 = vld [vmem:[%s1 + $0x3c] sm:$0xf]
      %v218 = vunpack.c.l.b16 %v186
      %v219 = vunpack.c.l.b16 %v187
      %v220 = vunpack.c.l.b16 %v188
      %v221 = vunpack.c.l.b16 %v189
      %v222 = vunpack.c.l.b16 %v190
      %v223 = vunpack.c.l.b16 %v191
      %v224 = vunpack.c.l.b16 %v192
      %v225 = vunpack.c.l.b16 %v193
      %v226 = vpack.c.b16 %v219, %v218
      %v227 = vpack.c.b16 %v221, %v220
      %v228 = vpack.c.b16 %v223, %v222
      %v229 = vpack.c.b16 %v225, %v224
      %v250 = vunpack.c.l.b16 %v194
      %v251 = vunpack.c.l.b16 %v195
      %v252 = vunpack.c.l.b16 %v196
      %v253 = vunpack.c.l.b16 %v197
      %v254 = vunpack.c.l.b16 %v198
      %v255 = vunpack.c.l.b16 %v199
      %v256 = vunpack.c.l.b16 %v200
      %v257 = vunpack.c.l.b16 %v201
      %v258 = vunpack.c.l.b16 %v202
      %v259 = vunpack.c.l.b16 %v203
      %v260 = vunpack.c.l.b16 %v204
      %v261 = vunpack.c.l.b16 %v205
      %v262 = vunpack.c.l.b16 %v206
      %v263 = vunpack.c.l.b16 %v207
      %v264 = vunpack.c.l.b16 %v208
      %v265 = vunpack.c.l.b16 %v209
      %v266 = vpack.c.b16 %v251, %v250
      %v267 = vpack.c.b16 %v253, %v252
      %v268 = vpack.c.b16 %v255, %v254
      %v269 = vpack.c.b16 %v257, %v256
      %v270 = vpack.c.b16 %v259, %v258
      %v271 = vpack.c.b16 %v261, %v260
      %v272 = vpack.c.b16 %v263, %v262
      %v273 = vpack.c.b16 %v265, %v264
      %282 = vmatprep.subr.bf16.mxu0 0
      %283 = vmatpush1.bf16.msra.mxu0 %v273
      %284 = vmatprep.subr.bf16.mxu0 0
      %285 = vmatpush1.bf16.msra.mxu0 %v272
      %286 = vmatprep.subr.bf16.mxu0 0
      %287 = vmatpush1.bf16.msra.mxu0 %v271
      %288 = vmatprep.subr.bf16.mxu0 0
      %289 = vmatpush1.bf16.msra.mxu0 %v270
      %290 = vmatprep.subr.bf16.mxu0 0
      %291 = vmatpush1.bf16.msra.mxu0 %v269
      %292 = vmatprep.subr.bf16.mxu0 0
      %293 = vmatpush1.bf16.msra.mxu0 %v268
      %294 = vmatprep.subr.bf16.mxu0 0
      %295 = vmatpush1.bf16.msra.mxu0 %v267
      %296 = vmatprep.subr.bf16.mxu0 0
      %297 = vmatpush1.bf16.msra.mxu0 %v266
      %298 = vmatprep.subr.bf16.mxu0 0
      %299 = vmatpush2.bf16.msra.mxu0 0
      %300 = vmatprep.subr.bf16.mxu0 0
      %301 = vmatpush2.bf16.msra.mxu0 0
      %302 = vmatprep.subr.bf16.mxu0 0
      %303 = vmatpush2.bf16.msra.mxu0 0
      %304 = vmatprep.subr.bf16.mxu0 0
      %305 = vmatpush2.bf16.msra.mxu0 0
      %306 = vmatprep.subr.bf16.mxu0 0
      %307 = vmatpush2.bf16.msra.mxu0 0
      %308 = vmatprep.subr.bf16.mxu0 0
      %309 = vmatpush2.bf16.msra.mxu0 0
      %310 = vmatprep.subr.bf16.mxu0 0
      %311 = vmatpush2.bf16.msra.mxu0 0
      %312 = vmatprep.subr.bf16.mxu0 0
      %313 = vmatpush2.bf16.msra.mxu0 0
      %314 = vmatprep.mubr.bf16.mxu0 0
      %315 = vmatmul.mubr.bf16.gmra.mxu0 %v226
      %v316 = vpop.f32.mrf.mxu0
      %v317 = vadd.f32 0.0, %v316
      %v318 = vpop.f32.mrf.mxu0
      %v319 = vpop.f32.mrf.mxu0
      %v320 = vadd.f32 0.0, %v319
      %v321 = vpop.f32.mrf.mxu0
      %322 = vmatprep.mubr.bf16.mxu0 0
      %323 = vmatmul.mubr.bf16.gmra.mxu0 %v227
      %v324 = vpop.f32.mrf.mxu0
      %v325 = vadd.f32 0.0, %v324
      %v326 = vpop.f32.mrf.mxu0
      %v327 = vpop.f32.mrf.mxu0
      %v328 = vadd.f32 0.0, %v327
      %v329 = vpop.f32.mrf.mxu0
      %330 = vmatprep.mubr.bf16.mxu0 0
      %331 = vmatmul.mubr.bf16.gmra.mxu0 %v228
      %v332 = vpop.f32.mrf.mxu0
      %v333 = vadd.f32 0.0, %v332
      %v334 = vpop.f32.mrf.mxu0
      %v335 = vpop.f32.mrf.mxu0
      %v336 = vadd.f32 0.0, %v335
      %v337 = vpop.f32.mrf.mxu0
      %338 = vmatprep.mubr.bf16.mxu0 0
      %339 = vmatmul.mubr.bf16.gmra.mxu0 %v229
      %v340 = vpop.f32.mrf.mxu0
      %v341 = vadd.f32 0.0, %v340
      %v342 = vpop.f32.mrf.mxu0
      %v343 = vpop.f32.mrf.mxu0
      %v344 = vadd.f32 0.0, %v343
      %v345 = vpop.f32.mrf.mxu0
      %346 = vdwg.mxu0
      %v347 = vpack.c.bf16 %v320, %v317
      %v348 = vpack.c.bf16 %v328, %v325
      %v349 = vpack.c.bf16 %v336, %v333
      %v350 = vpack.c.bf16 %v344, %v341
      %v355 = vunpack.c.l.b16 %v347
      %v356 = vunpack.c.h.b16 %v347
      %v357 = vunpack.c.l.b16 %v348
      %v358 = vunpack.c.h.b16 %v348
      %v359 = vunpack.c.l.b16 %v349
      %v360 = vunpack.c.h.b16 %v349
      %v361 = vunpack.c.l.b16 %v350
      %v362 = vunpack.c.h.b16 %v350
      %v363 = vpack.c.b16 %v355, %v355
      %v364 = vpack.c.b16 %v356, %v356
      %v365 = vpack.c.b16 %v357, %v357
      %v366 = vpack.c.b16 %v358, %v358
      %v367 = vpack.c.b16 %v359, %v359
      %v368 = vpack.c.b16 %v360, %v360
      %v369 = vpack.c.b16 %v361, %v361
      %v370 = vpack.c.b16 %v362, %v362
      %379 = vst [vmem:[%s179] sm:$0xf] %v363
      %380 = vst [vmem:[%s179 + $0x4] sm:$0xf] %v364
      %381 = vst [vmem:[%s179 + $0x8] sm:$0xf] %v365
      %382 = vst [vmem:[%s179 + $0xc] sm:$0xf] %v366
      %383 = vst [vmem:[%s179 + $0x10] sm:$0xf] %v367
      %384 = vst [vmem:[%s179 + $0x14] sm:$0xf] %v368
      %385 = vst [vmem:[%s179 + $0x18] sm:$0xf] %v369
      %386 = vst [vmem:[%s179 + $0x1c] sm:$0xf] %v370
      %v387 = vadd.f32 %v317, %v320
      %v388 = vadd.f32 %v387, %v325
      %v389 = vadd.f32 %v388, %v328
      %v390 = vadd.f32 %v389, %v333
      %v391 = vadd.f32 %v390, %v336
      %v392 = vadd.f32 %v391, %v341
      %v393 = vadd.f32 %v392, %v344
      %v394 = vrot.slane %v393, 4
      %v395 = vadd.f32 %v393, %v394
      %v396 = vrot.slane %v395, 2
      %v397 = vadd.f32 %v395, %v396
      %v398 = vrot.slane %v397, 1
      %v399 = vadd.f32 %v397, %v398
      %v400 = vmul.f32 %v317, %v317
      %v401 = vmul.f32 %v320, %v320
      %v402 = vmul.f32 %v325, %v325
      %v403 = vmul.f32 %v328, %v328
      %v404 = vmul.f32 %v333, %v333
      %v405 = vmul.f32 %v336, %v336
      %v406 = vmul.f32 %v341, %v341
      %v407 = vmul.f32 %v344, %v344
      %v408 = vadd.f32 %v400, %v401
      %v409 = vadd.f32 %v408, %v402
      %v410 = vadd.f32 %v409, %v403
      %v411 = vadd.f32 %v410, %v404
      %v412 = vadd.f32 %v411, %v405
      %v413 = vadd.f32 %v412, %v406
      %v414 = vadd.f32 %v413, %v407
      %v415 = vrot.slane %v414, 4
      %v416 = vadd.f32 %v414, %v415
      %v417 = vrot.slane %v416, 2
      %v418 = vadd.f32 %v416, %v417
      %v419 = vrot.slane %v418, 1
      %v420 = vadd.f32 %v418, %v419
      %vm421 = vcmask 1040384
      %v422 = vsel %vm421, %v399, %v420
      %423 = vst [vmem:[%s184] sm:$0x3] %v422
      %s424 = smul.u32 8, %s15
      %p425 = scmp.lt.s32.totalorder %s424, 15
      %s426 = scalar_select %p425, %s424, 15
      %s427 = smul.addr %s426, 4
      %s428 = scalar_lea.vmem %s2, %s427
      %p429 = scmp.lt.s32.totalorder %s15, 1
      %s430 = scalar_select %p429, %s15, 1
      %s431 = smul.addr %s430, 2
      %s432 = scalar_lea.vmem %s3, %s431
      // Predicated region
      $region29: #{basic_block_forward.5} parent=27 // pred_check
        %p433 = pneg %p80
      $region30: #{basic_block_forward.5} parent=27 // pred_check_branch
        %435 = sbr.rel (%p433) target = $region32
      $region31: #{basic_block_forward.5} parent=27 // pred_region
        %s436 = smul.u32 8, %s15
      $region32: #{basic_block_forward.5} parent=27 // pred_fallthru
        _
      // Predicated region
      $region33: #{basic_block_forward.5} parent=27 // pred_check
        %p437 = pneg %p106
      $region34: #{basic_block_forward.5} parent=27 // pred_check_branch
        %439 = sbr.rel (%p437) target = $region36
      $region35: #{basic_block_forward.5} parent=27 // pred_region
        _
      $region36: #{basic_block_forward.5} parent=27 // pred_fallthru
        _
    $region28: #{basic_block_forward.5} parent=5 // pred_fallthru
      _
    %p440 = scmp.le.s32.totalorder 2, %s10
    // Predicated region
    $region37: #{basic_block_forward.5} parent=5 // pred_check
      %p441 = pneg %p440
    $region38: #{basic_block_forward.5} parent=5 // pred_check_branch
      %443 = sbr.rel (%p441) target = $region40
    $region39: #{basic_block_forward.5} parent=5 // pred_region
      %s444 = ssub.s32 %s10, 2
      // Predicated region
      $region41: #{basic_block_forward.5} parent=39 // pred_check
        %p445 = pneg %p86
      $region42: #{basic_block_forward.5} parent=39 // pred_check_branch
        %447 = sbr.rel (%p445) target = $region44
      $region43: #{basic_block_forward.5} parent=39 // pred_region
        %s448 = smul.u32 8, %s16
        %p449 = scmp.lt.s32.totalorder %s448, 15
        %s450 = scalar_select %p449, %s448, 15
        %s451 = smul.addr %s450, 4
        %s452 = scalar_lea.vmem %s2, %s451
      $region44: #{basic_block_forward.5} parent=39 // pred_fallthru
        _
      // Predicated region
      $region45: #{basic_block_forward.5} parent=39 // pred_check
        %p453 = pneg %p112
      $region46: #{basic_block_forward.5} parent=39 // pred_check_branch
        %455 = sbr.rel (%p453) target = $region48
      $region47: #{basic_block_forward.5} parent=39 // pred_region
        %p456 = scmp.lt.s32.totalorder %s16, 1
        %s457 = scalar_select %p456, %s16, 1
        %s458 = smul.addr %s457, 2
        %s459 = scalar_lea.vmem %s3, %s458
      $region48: #{basic_block_forward.5} parent=39 // pred_fallthru
        _
    $region40: #{basic_block_forward.5} parent=5 // pred_fallthru
      _
  $region6: #{basic_block_forward.5} parent=0 // loop_footer
    %s14 = sadd.s32 1, %s10
  $region7: #{basic_block_forward.5} parent=0 // loop_footer_branch
    %9 = sbr.rel target = $region3
  $region8: #{basic_block_forward.5} parent=0 // loop_exit
    _

// kernel: basic_block_forward.8
$region0: #{basic_block_forward.8}
  #allocation0 [shape = 'u32[]', space=smem, size = 0x4, offset = 0x4, fixed_abs, tag = 'smem constant byte address 0x4 - core index']
  #allocation1 [shape = 'u32[144,128]{1,0:T(1,128)}', space=vmem, size = 0x12000, scoped, tag = 'internal scratch']
  %s0 = inlined_call_operand.vmem [shape: bf16[128,128], index: 0, kind: input, shape index: {}]
  %s1 = inlined_call_operand.vmem [shape: bf16[128,128], index: 1, kind: input, shape index: {}]
  %s2 = inlined_call_operand.vmem [shape: f32[2,2,128], index: 2, kind: output, shape index: {}]
  %s3 = sld [smem:[#allocation0]]
  $region41: #{basic_block_forward.8} parent=0
    _
  %s5 = ssub.s32 1, %s3
  %s6 = scalar_select 0, %s5, %s3
  loop: start=0, step=1, limit=4
  $region2: #{basic_block_forward.8} parent=0 // loop_pre_header
    _
  $region3: #{basic_block_forward.8} parent=0 // loop_header
    %s8 = sphi 0, %s12
    %p9 = scmp.ge.s32.totalorder %s8, 4
    %s18 = sphi 0, %s20
    %s21 = sphi 0, %s18
    %s22 = sphi 0, %s21
    %s38 = sphi 0, %s22
    %s42 = sphi 0, %s42
    %s44 = sphi 0, %s42
    %s45 = sphi 0, %s44
    %s59 = sphi 0, %s45
    %s65 = sphi 0, %s67
    %s68 = sphi 0, %s65
    %s69 = sphi 0, %s68
    %s85 = sphi 0, %s69
  $region4: #{basic_block_forward.8} parent=0 // loop_header_branch
    %11 = sbr.rel (%p9) target = $region8
  $region5: #{basic_block_forward.8} parent=0 // loop_body
    %s13 = ssub.s32 %s8, 1
    %s14 = ssub.s32 %s8, 2
    %s15 = sadd.s32 %s8, 1
    %s16 = ssub.s32 %s8, %s15
    %p17 = scmp.eq.s32.totalorder %s16, 0
    %s19 = sadd.s32 %s18, 1
    %s20 = scalar_select %p17, %s18, %s19
    %p23 = pneg %p17
    %p24 = scmp.eq.s32.totalorder %s8, 1
    %p25 = por %p23, %p24
    %p26 = scmp.ne.s32.totalorder %s18, %s21
    %p27 = scmp.eq.s32.totalorder %s8, 0
    %p28 = por %p26, %p27
    %p29 = scmp.ne.s32.totalorder %s18, %s21
    %p30 = scmp.eq.s32.totalorder %s13, 1
    %p31 = por %p29, %p30
    %p32 = scmp.ne.s32.totalorder %s21, %s22
    %p33 = scmp.eq.s32.totalorder %s13, 0
    %p34 = por %p32, %p33
    %p35 = scmp.ne.s32.totalorder %s21, %s22
    %p36 = scmp.eq.s32.totalorder %s14, 1
    %p37 = por %p35, %p36
    %p39 = scmp.ne.s32.totalorder %s22, %s38
    %p40 = scmp.eq.s32.totalorder %s14, 0
    %p41 = por %p39, %p40
    %s43 = sadd.s32 %s42, 1
    %p46 = scmp.eq.s32.totalorder %s8, 1
    %p47 = scmp.ne.s32.totalorder %s42, %s44
    %p48 = scmp.eq.s32.totalorder %s8, 0
    %p49 = por %p47, %p48
    %p50 = scmp.ne.s32.totalorder %s42, %s44
    %p51 = scmp.eq.s32.totalorder %s13, 1
    %p52 = por %p50, %p51
    %p53 = scmp.ne.s32.totalorder %s44, %s45
    %p54 = scmp.eq.s32.totalorder %s13, 0
    %p55 = por %p53, %p54
    %p56 = scmp.ne.s32.totalorder %s44, %s45
    %p57 = scmp.eq.s32.totalorder %s14, 1
    %p58 = por %p56, %p57
    %p60 = scmp.ne.s32.totalorder %s45, %s59
    %p61 = scmp.eq.s32.totalorder %s14, 0
    %p62 = por %p60, %p61
    %s63 = ssub.s32 %s8, %s15
    %p64 = scmp.eq.s32.totalorder %s63, 0
    %s66 = sadd.s32 %s65, 1
    %s67 = scalar_select %p64, %s65, %s66
    %p70 = pneg %p64
    %p71 = scmp.eq.s32.totalorder %s8, 1
    %p72 = por %p70, %p71
    %p73 = scmp.ne.s32.totalorder %s65, %s68
    %p74 = scmp.eq.s32.totalorder %s8, 0
    %p75 = por %p73, %p74
    %p76 = scmp.ne.s32.totalorder %s65, %s68
    %p77 = scmp.eq.s32.totalorder %s13, 1
    %p78 = por %p76, %p77
    %p79 = scmp.ne.s32.totalorder %s68, %s69
    %p80 = scmp.eq.s32.totalorder %s13, 0
    %p81 = por %p79, %p80
    %p82 = scmp.ne.s32.totalorder %s68, %s69
    %p83 = scmp.eq.s32.totalorder %s14, 1
    %p84 = por %p82, %p83
    %p86 = scmp.ne.s32.totalorder %s69, %s85
    %p87 = scmp.eq.s32.totalorder %s14, 0
    %p88 = por %p86, %p87
    %p89 = scmp.le.s32.totalorder 1, %s8
    %p90 = scmp.lt.s32.totalorder %s8, 3
    %p91 = pnand %p89, %p90
    %p92 = pneg %p91
    // Predicated region
    $region9: #{basic_block_forward.8} parent=5 // pred_check
      _
    $region10: #{basic_block_forward.8} parent=5 // pred_check_branch
      %94 = sbr.rel (%p91) target = $region12
    $region11: #{basic_block_forward.8} parent=5 // pred_region
      %s95 = ssub.s32 %s8, 1
      // Predicated region
      $region13: #{basic_block_forward.8} parent=11 // pred_check
        %p96 = pneg %p55
      $region14: #{basic_block_forward.8} parent=11 // pred_check_branch
        %98 = sbr.rel (%p96) target = $region16
      $region15: #{basic_block_forward.8} parent=11 // pred_region
        _
      $region16: #{basic_block_forward.8} parent=11 // pred_fallthru
        _
    $region12: #{basic_block_forward.8} parent=5 // pred_fallthru
      _
    %p99 = scmp.lt.s32.totalorder %s8, 2
    // Predicated region
    $region17: #{basic_block_forward.8} parent=5 // pred_check
      %p100 = pneg %p99
    $region18: #{basic_block_forward.8} parent=5 // pred_check_branch
      %102 = sbr.rel (%p100) target = $region20
    $region19: #{basic_block_forward.8} parent=5 // pred_region
      // Predicated region
      $region21: #{basic_block_forward.8} parent=19 // pred_check
        %p103 = pneg %p28
      $region22: #{basic_block_forward.8} parent=19 // pred_check_branch
        %105 = sbr.rel (%p103) target = $region24
      $region23: #{basic_block_forward.8} parent=19 // pred_region
        %s106 = smul.u32 8, %s8
        %p107 = scmp.lt.s32.totalorder %s106, 15
        %s108 = scalar_select %p107, %s106, 15
        %s109 = smul.addr %s108, 4
        %s110 = scalar_lea.vmem %s0, %s109
        %s111 = smul.u32 8, %s8
      $region24: #{basic_block_forward.8} parent=19 // pred_fallthru
        _
    $region20: #{basic_block_forward.8} parent=5 // pred_fallthru
      _
    %p112 = scmp.le.s32.totalorder 1, %s8
    %p113 = scmp.lt.s32.totalorder %s8, 3
    %p114 = pnand %p112, %p113
    %p115 = pneg %p114
    // Predicated region
    $region25: #{basic_block_forward.8} parent=5 // pred_check
      _
    $region26: #{basic_block_forward.8} parent=5 // pred_check_branch
      %117 = sbr.rel (%p114) target = $region28
    $region27: #{basic_block_forward.8} parent=5 // pred_region
      %s118 = ssub.s32 %s8, 1
      %s119 = smul.u32 8, %s13
      %p120 = scmp.lt.s32.totalorder %s119, 15
      %s121 = scalar_select %p120, %s119, 15
      %s122 = smul.addr %s121, 4
      %s123 = scalar_lea.vmem %s0, %s122
      %p124 = pneg %p34
      %p125 = pneg %p31
      %p126 = pneg %p55
      %p127 = pneg %p52
      %p128 = pneg %p81
      %p129 = pneg %p78
      %p130 = scmp.lt.s32.totalorder %s13, 1
      %s131 = scalar_select %p130, %s13, 1
      %s132 = smul.addr %s131, 2
      %s133 = scalar_lea.vmem %s2, %s132
      %s134 = smul.u32 8, %s13
      %p135 = scmp.lt.s32.totalorder %s134, 15
      %s136 = scalar_select %p135, %s134, 15
      %s137 = smul.addr %s136, 4
      %s138 = scalar_lea.vmem %s0, %s137
      %s139 = smul.u32 8, %s13
      %p140 = scmp.lt.s32.totalorder %s13, 1
      %s141 = scalar_select %p140, %s13, 1
      %s142 = smul.addr %s141, 2
      %s143 = scalar_lea.vmem %s2, %s142
      %v145 = vld [vmem:[%s138] sm:$0xf]
      %v146 = vld [vmem:[%s138 + $0x4] sm:$0xf]
      %v147 = vld [vmem:[%s138 + $0x8] sm:$0xf]
      %v148 = vld [vmem:[%s138 + $0xc] sm:$0xf]
      %v149 = vld [vmem:[%s138 + $0x10] sm:$0xf]
      %v150 = vld [vmem:[%s138 + $0x14] sm:$0xf]
      %v151 = vld [vmem:[%s138 + $0x18] sm:$0xf]
      %v152 = vld [vmem:[%s138 + $0x1c] sm:$0xf]
      %v153 = vld [vmem:[%s1] sm:$0xf]
      %v154 = vld [vmem:[%s1 + $0x4] sm:$0xf]
      %v155 = vld [vmem:[%s1 + $0x8] sm:$0xf]
      %v156 = vld [vmem:[%s1 + $0xc] sm:$0xf]
      %v157 = vld [vmem:[%s1 + $0x10] sm:$0xf]
      %v158 = vld [vmem:[%s1 + $0x14] sm:$0xf]
      %v159 = vld [vmem:[%s1 + $0x18] sm:$0xf]
      %v160 = vld [vmem:[%s1 + $0x1c] sm:$0xf]
      %v161 = vld [vmem:[%s1 + $0x20] sm:$0xf]
      %v162 = vld [vmem:[%s1 + $0x24] sm:$0xf]
      %v163 = vld [vmem:[%s1 + $0x28] sm:$0xf]
      %v164 = vld [vmem:[%s1 + $0x2c] sm:$0xf]
      %v165 = vld [vmem:[%s1 + $0x30] sm:$0xf]
      %v166 = vld [vmem:[%s1 + $0x34] sm:$0xf]
      %v167 = vld [vmem:[%s1 + $0x38] sm:$0xf]
      %v168 = vld [vmem:[%s1 + $0x3c] sm:$0xf]
      %v177 = vunpack.c.l.b16 %v145
      %v178 = vunpack.c.l.b16 %v146
      %v179 = vunpack.c.l.b16 %v147
      %v180 = vunpack.c.l.b16 %v148
      %v181 = vunpack.c.l.b16 %v149
      %v182 = vunpack.c.l.b16 %v150
      %v183 = vunpack.c.l.b16 %v151
      %v184 = vunpack.c.l.b16 %v152
      %v185 = vpack.c.b16 %v178, %v177
      %v186 = vpack.c.b16 %v180, %v179
      %v187 = vpack.c.b16 %v182, %v181
      %v188 = vpack.c.b16 %v184, %v183
      %v209 = vunpack.c.l.b16 %v153
      %v210 = vunpack.c.l.b16 %v154
      %v211 = vunpack.c.l.b16 %v155
      %v212 = vunpack.c.l.b16 %v156
      %v213 = vunpack.c.l.b16 %v157
      %v214 = vunpack.c.l.b16 %v158
      %v215 = vunpack.c.l.b16 %v159
      %v216 = vunpack.c.l.b16 %v160
      %v217 = vunpack.c.l.b16 %v161
      %v218 = vunpack.c.l.b16 %v162
      %v219 = vunpack.c.l.b16 %v163
      %v220 = vunpack.c.l.b16 %v164
      %v221 = vunpack.c.l.b16 %v165
      %v222 = vunpack.c.l.b16 %v166
      %v223 = vunpack.c.l.b16 %v167
      %v224 = vunpack.c.l.b16 %v168
      %v225 = vpack.c.b16 %v210, %v209
      %v226 = vpack.c.b16 %v212, %v211
      %v227 = vpack.c.b16 %v214, %v213
      %v228 = vpack.c.b16 %v216, %v215
      %v229 = vpack.c.b16 %v218, %v217
      %v230 = vpack.c.b16 %v220, %v219
      %v231 = vpack.c.b16 %v222, %v221
      %v232 = vpack.c.b16 %v224, %v223
      %241 = vmatprep.subr.bf16.mxu0 0
      %242 = vmatpush1.bf16.msra.mxu0 %v232
      %243 = vmatprep.subr.bf16.mxu0 0
      %244 = vmatpush1.bf16.msra.mxu0 %v231
      %245 = vmatprep.subr.bf16.mxu0 0
      %246 = vmatpush1.bf16.msra.mxu0 %v230
      %247 = vmatprep.subr.bf16.mxu0 0
      %248 = vmatpush1.bf16.msra.mxu0 %v229
      %249 = vmatprep.subr.bf16.mxu0 0
      %250 = vmatpush1.bf16.msra.mxu0 %v228
      %251 = vmatprep.subr.bf16.mxu0 0
      %252 = vmatpush1.bf16.msra.mxu0 %v227
      %253 = vmatprep.subr.bf16.mxu0 0
      %254 = vmatpush1.bf16.msra.mxu0 %v226
      %255 = vmatprep.subr.bf16.mxu0 0
      %256 = vmatpush1.bf16.msra.mxu0 %v225
      %257 = vmatprep.subr.bf16.mxu0 0
      %258 = vmatpush2.bf16.msra.mxu0 0
      %259 = vmatprep.subr.bf16.mxu0 0
      %260 = vmatpush2.bf16.msra.mxu0 0
      %261 = vmatprep.subr.bf16.mxu0 0
      %262 = vmatpush2.bf16.msra.mxu0 0
      %263 = vmatprep.subr.bf16.mxu0 0
      %264 = vmatpush2.bf16.msra.mxu0 0
      %265 = vmatprep.subr.bf16.mxu0 0
      %266 = vmatpush2.bf16.msra.mxu0 0
      %267 = vmatprep.subr.bf16.mxu0 0
      %268 = vmatpush2.bf16.msra.mxu0 0
      %269 = vmatprep.subr.bf16.mxu0 0
      %270 = vmatpush2.bf16.msra.mxu0 0
      %271 = vmatprep.subr.bf16.mxu0 0
      %272 = vmatpush2.bf16.msra.mxu0 0
      %273 = vmatprep.mubr.bf16.mxu0 0
      %274 = vmatmul.mubr.bf16.gmra.mxu0 %v185
      %v275 = vpop.f32.mrf.mxu0
      %v276 = vadd.f32 0.0, %v275
      %v277 = vpop.f32.mrf.mxu0
      %v278 = vpop.f32.mrf.mxu0
      %v279 = vadd.f32 0.0, %v278
      %v280 = vpop.f32.mrf.mxu0
      %281 = vmatprep.mubr.bf16.mxu0 0
      %282 = vmatmul.mubr.bf16.gmra.mxu0 %v186
      %v283 = vpop.f32.mrf.mxu0
      %v284 = vadd.f32 0.0, %v283
      %v285 = vpop.f32.mrf.mxu0
      %v286 = vpop.f32.mrf.mxu0
      %v287 = vadd.f32 0.0, %v286
      %v288 = vpop.f32.mrf.mxu0
      %289 = vmatprep.mubr.bf16.mxu0 0
      %290 = vmatmul.mubr.bf16.gmra.mxu0 %v187
      %v291 = vpop.f32.mrf.mxu0
      %v292 = vadd.f32 0.0, %v291
      %v293 = vpop.f32.mrf.mxu0
      %v294 = vpop.f32.mrf.mxu0
      %v295 = vadd.f32 0.0, %v294
      %v296 = vpop.f32.mrf.mxu0
      %297 = vmatprep.mubr.bf16.mxu0 0
      %298 = vmatmul.mubr.bf16.gmra.mxu0 %v188
      %v299 = vpop.f32.mrf.mxu0
      %v300 = vadd.f32 0.0, %v299
      %v301 = vpop.f32.mrf.mxu0
      %v302 = vpop.f32.mrf.mxu0
      %v303 = vadd.f32 0.0, %v302
      %v304 = vpop.f32.mrf.mxu0
      %305 = vdwg.mxu0
      %v306 = vadd.f32 %v276, %v279
      %v307 = vadd.f32 %v306, %v284
      %v308 = vadd.f32 %v307, %v287
      %v309 = vadd.f32 %v308, %v292
      %v310 = vadd.f32 %v309, %v295
      %v311 = vadd.f32 %v310, %v300
      %v312 = vadd.f32 %v311, %v303
      %v313 = vrot.slane %v312, 4
      %v314 = vadd.f32 %v312, %v313
      %v315 = vrot.slane %v314, 2
      %v316 = vadd.f32 %v314, %v315
      %v317 = vrot.slane %v316, 1
      %v318 = vadd.f32 %v316, %v317
      %v319 = vmul.f32 %v276, %v276
      %v320 = vmul.f32 %v279, %v279
      %v321 = vmul.f32 %v284, %v284
      %v322 = vmul.f32 %v287, %v287
      %v323 = vmul.f32 %v292, %v292
      %v324 = vmul.f32 %v295, %v295
      %v325 = vmul.f32 %v300, %v300
      %v326 = vmul.f32 %v303, %v303
      %v327 = vadd.f32 %v319, %v320
      %v328 = vadd.f32 %v327, %v321
      %v329 = vadd.f32 %v328, %v322
      %v330 = vadd.f32 %v329, %v323
      %v331 = vadd.f32 %v330, %v324
      %v332 = vadd.f32 %v331, %v325
      %v333 = vadd.f32 %v332, %v326
      %v334 = vrot.slane %v333, 4
      %v335 = vadd.f32 %v333, %v334
      %v336 = vrot.slane %v335, 2
      %v337 = vadd.f32 %v335, %v336
      %v338 = vrot.slane %v337, 1
      %v339 = vadd.f32 %v337, %v338
      %vm340 = vcmask 1040384
      %v341 = vsel %vm340, %v318, %v339
      %342 = vst [vmem:[%s143] sm:$0x3] %v341
      %p343 = scmp.lt.s32.totalorder %s13, 1
      %s344 = scalar_select %p343, %s13, 1
      %s345 = smul.addr %s344, 2
      %s346 = scalar_lea.vmem %s2, %s345
      // Predicated region
      $region29: #{basic_block_forward.8} parent=27 // pred_check
        %p347 = pneg %p78
      $region30: #{basic_block_forward.8} parent=27 // pred_check_branch
        %349 = sbr.rel (%p347) target = $region32
      $region31: #{basic_block_forward.8} parent=27 // pred_region
        _
      $region32: #{basic_block_forward.8} parent=27 // pred_fallthru
        _
    $region28: #{basic_block_forward.8} parent=5 // pred_fallthru
      _
    %p350 = scmp.le.s32.totalorder 2, %s8
    // Predicated region
    $region33: #{basic_block_forward.8} parent=5 // pred_check
      %p351 = pneg %p350
    $region34: #{basic_block_forward.8} parent=5 // pred_check_branch
      %353 = sbr.rel (%p351) target = $region36
    $region35: #{basic_block_forward.8} parent=5 // pred_region
      %s354 = ssub.s32 %s8, 2
      // Predicated region
      $region37: #{basic_block_forward.8} parent=35 // pred_check
        %p355 = pneg %p84
      $region38: #{basic_block_forward.8} parent=35 // pred_check_branch
        %357 = sbr.rel (%p355) target = $region40
      $region39: #{basic_block_forward.8} parent=35 // pred_region
        %p358 = scmp.lt.s32.totalorder %s14, 1
        %s359 = scalar_select %p358, %s14, 1
        %s360 = smul.addr %s359, 2
        %s361 = scalar_lea.vmem %s2, %s360
      $region40: #{basic_block_forward.8} parent=35 // pred_fallthru
        _
    $region36: #{basic_block_forward.8} parent=5 // pred_fallthru
      _
  $region6: #{basic_block_forward.8} parent=0 // loop_footer
    %s12 = sadd.s32 1, %s8
  $region7: #{basic_block_forward.8} parent=0 // loop_footer_branch
    %7 = sbr.rel target = $region3
  $region8: #{basic_block_forward.8} parent=0 // loop_exit
    _

// kernel: basic_block_forward.9
$region0: #{basic_block_forward.9}
  #allocation0 [shape = 'u32[]', space=smem, size = 0x4, offset = 0x4, fixed_abs, tag = 'smem constant byte address 0x4 - core index']
  #allocation1 [shape = 'u32[144,128]{1,0:T(1,128)}', space=vmem, size = 0x12000, scoped, tag = 'internal scratch']
  %s0 = inlined_call_operand.vmem [shape: bf16[128,128], index: 0, kind: input, shape index: {}]
  %s1 = inlined_call_operand.vmem [shape: bf16[128,128], index: 1, kind: input, shape index: {}]
  %s2 = inlined_call_operand.vmem [shape: bf16[128,128], index: 2, kind: input, shape index: {}]
  %s3 = inlined_call_operand.vmem [shape: f32[1,128], index: 3, kind: input, shape index: {}]
  %s4 = inlined_call_operand.vmem [shape: f32[1,128], index: 4, kind: input, shape index: {}]
  %s5 = inlined_call_operand.vmem [shape: f32[1,128], index: 5, kind: input, shape index: {}]
  %s6 = inlined_call_operand.vmem [shape: f32[1,128], index: 6, kind: input, shape index: {}]
  %s7 = inlined_call_operand.vmem [shape: f32[128,128], index: 7, kind: output, shape index: {}]
  %s8 = sld [smem:[#allocation0]]
  $region61: #{basic_block_forward.9} parent=0
    _
  %s10 = ssub.s32 1, %s8
  %s11 = scalar_select 0, %s10, %s8
  loop: start=0, step=1, limit=4
  $region2: #{basic_block_forward.9} parent=0 // loop_pre_header
    _
  $region3: #{basic_block_forward.9} parent=0 // loop_header
    %s13 = sphi 0, %s17
    %p14 = scmp.ge.s32.totalorder %s13, 4
    %s23 = sphi 0, %s25
    %s26 = sphi 0, %s23
    %s27 = sphi 0, %s26
    %s43 = sphi 0, %s27
    %s49 = sphi 0, %s51
    %s52 = sphi 0, %s49
    %s53 = sphi 0, %s52
    %s69 = sphi 0, %s53
    %s73 = sphi 0, %s73
    %s75 = sphi 0, %s73
    %s76 = sphi 0, %s75
    %s90 = sphi 0, %s76
    %s94 = sphi 0, %s94
    %s96 = sphi 0, %s94
    %s97 = sphi 0, %s96
    %s111 = sphi 0, %s97
    %s115 = sphi 0, %s115
    %s117 = sphi 0, %s115
    %s118 = sphi 0, %s117
    %s132 = sphi 0, %s118
    %s136 = sphi 0, %s136
    %s138 = sphi 0, %s136
    %s139 = sphi 0, %s138
    %s153 = sphi 0, %s139
    %s157 = sphi 0, %s157
    %s159 = sphi 0, %s157
    %s160 = sphi 0, %s159
    %s174 = sphi 0, %s160
    %s180 = sphi 0, %s182
    %s183 = sphi 0, %s180
    %s184 = sphi 0, %s183
    %s200 = sphi 0, %s184
  $region4: #{basic_block_forward.9} parent=0 // loop_header_branch
    %16 = sbr.rel (%p14) target = $region8
  $region5: #{basic_block_forward.9} parent=0 // loop_body
    %s18 = ssub.s32 %s13, 1
    %s19 = ssub.s32 %s13, 2
    %s20 = sadd.s32 %s13, 1
    %s21 = ssub.s32 %s13, %s20
    %p22 = scmp.eq.s32.totalorder %s21, 0
    %s24 = sadd.s32 %s23, 1
    %s25 = scalar_select %p22, %s23, %s24
    %p28 = pneg %p22
    %p29 = scmp.eq.s32.totalorder %s13, 1
    %p30 = por %p28, %p29
    %p31 = scmp.ne.s32.totalorder %s23, %s26
    %p32 = scmp.eq.s32.totalorder %s13, 0
    %p33 = por %p31, %p32
    %p34 = scmp.ne.s32.totalorder %s23, %s26
    %p35 = scmp.eq.s32.totalorder %s18, 1
    %p36 = por %p34, %p35
    %p37 = scmp.ne.s32.totalorder %s26, %s27
    %p38 = scmp.eq.s32.totalorder %s18, 0
    %p39 = por %p37, %p38
    %p40 = scmp.ne.s32.totalorder %s26, %s27
    %p41 = scmp.eq.s32.totalorder %s19, 1
    %p42 = por %p40, %p41
    %p44 = scmp.ne.s32.totalorder %s27, %s43
    %p45 = scmp.eq.s32.totalorder %s19, 0
    %p46 = por %p44, %p45
    %s47 = ssub.s32 %s13, %s20
    %p48 = scmp.eq.s32.totalorder %s47, 0
    %s50 = sadd.s32 %s49, 1
    %s51 = scalar_select %p48, %s49, %s50
    %p54 = pneg %p48
    %p55 = scmp.eq.s32.totalorder %s13, 1
    %p56 = por %p54, %p55
    %p57 = scmp.ne.s32.totalorder %s49, %s52
    %p58 = scmp.eq.s32.totalorder %s13, 0
    %p59 = por %p57, %p58
    %p60 = scmp.ne.s32.totalorder %s49, %s52
    %p61 = scmp.eq.s32.totalorder %s18, 1
    %p62 = por %p60, %p61
    %p63 = scmp.ne.s32.totalorder %s52, %s53
    %p64 = scmp.eq.s32.totalorder %s18, 0
    %p65 = por %p63, %p64
    %p66 = scmp.ne.s32.totalorder %s52, %s53
    %p67 = scmp.eq.s32.totalorder %s19, 1
    %p68 = por %p66, %p67
    %p70 = scmp.ne.s32.totalorder %s53, %s69
    %p71 = scmp.eq.s32.totalorder %s19, 0
    %p72 = por %p70, %p71
    %s74 = sadd.s32 %s73, 1
    %p77 = scmp.eq.s32.totalorder %s13, 1
    %p78 = scmp.ne.s32.totalorder %s73, %s75
    %p79 = scmp.eq.s32.totalorder %s13, 0
    %p80 = por %p78, %p79
    %p81 = scmp.ne.s32.totalorder %s73, %s75
    %p82 = scmp.eq.s32.totalorder %s18, 1
    %p83 = por %p81, %p82
    %p84 = scmp.ne.s32.totalorder %s75, %s76
    %p85 = scmp.eq.s32.totalorder %s18, 0
    %p86 = por %p84, %p85
    %p87 = scmp.ne.s32.totalorder %s75, %s76
    %p88 = scmp.eq.s32.totalorder %s19, 1
    %p89 = por %p87, %p88
    %p91 = scmp.ne.s32.totalorder %s76, %s90
    %p92 = scmp.eq.s32.totalorder %s19, 0
    %p93 = por %p91, %p92
    %s95 = sadd.s32 %s94, 1
    %p98 = scmp.eq.s32.totalorder %s13, 1
    %p99 = scmp.ne.s32.totalorder %s94, %s96
    %p100 = scmp.eq.s32.totalorder %s13, 0
    %p101 = por %p99, %p100
    %p102 = scmp.ne.s32.totalorder %s94, %s96
    %p103 = scmp.eq.s32.totalorder %s18, 1
    %p104 = por %p102, %p103
    %p105 = scmp.ne.s32.totalorder %s96, %s97
    %p106 = scmp.eq.s32.totalorder %s18, 0
    %p107 = por %p105, %p106
    %p108 = scmp.ne.s32.totalorder %s96, %s97
    %p109 = scmp.eq.s32.totalorder %s19, 1
    %p110 = por %p108, %p109
    %p112 = scmp.ne.s32.totalorder %s97, %s111
    %p113 = scmp.eq.s32.totalorder %s19, 0
    %p114 = por %p112, %p113
    %s116 = sadd.s32 %s115, 1
    %p119 = scmp.eq.s32.totalorder %s13, 1
    %p120 = scmp.ne.s32.totalorder %s115, %s117
    %p121 = scmp.eq.s32.totalorder %s13, 0
    %p122 = por %p120, %p121
    %p123 = scmp.ne.s32.totalorder %s115, %s117
    %p124 = scmp.eq.s32.totalorder %s18, 1
    %p125 = por %p123, %p124
    %p126 = scmp.ne.s32.totalorder %s117, %s118
    %p127 = scmp.eq.s32.totalorder %s18, 0
    %p128 = por %p126, %p127
    %p129 = scmp.ne.s32.totalorder %s117, %s118
    %p130 = scmp.eq.s32.totalorder %s19, 1
    %p131 = por %p129, %p130
    %p133 = scmp.ne.s32.totalorder %s118, %s132
    %p134 = scmp.eq.s32.totalorder %s19, 0
    %p135 = por %p133, %p134
    %s137 = sadd.s32 %s136, 1
    %p140 = scmp.eq.s32.totalorder %s13, 1
    %p141 = scmp.ne.s32.totalorder %s136, %s138
    %p142 = scmp.eq.s32.totalorder %s13, 0
    %p143 = por %p141, %p142
    %p144 = scmp.ne.s32.totalorder %s136, %s138
    %p145 = scmp.eq.s32.totalorder %s18, 1
    %p146 = por %p144, %p145
    %p147 = scmp.ne.s32.totalorder %s138, %s139
    %p148 = scmp.eq.s32.totalorder %s18, 0
    %p149 = por %p147, %p148
    %p150 = scmp.ne.s32.totalorder %s138, %s139
    %p151 = scmp.eq.s32.totalorder %s19, 1
    %p152 = por %p150, %p151
    %p154 = scmp.ne.s32.totalorder %s139, %s153
    %p155 = scmp.eq.s32.totalorder %s19, 0
    %p156 = por %p154, %p155
    %s158 = sadd.s32 %s157, 1
    %p161 = scmp.eq.s32.totalorder %s13, 1
    %p162 = scmp.ne.s32.totalorder %s157, %s159
    %p163 = scmp.eq.s32.totalorder %s13, 0
    %p164 = por %p162, %p163
    %p165 = scmp.ne.s32.totalorder %s157, %s159
    %p166 = scmp.eq.s32.totalorder %s18, 1
    %p167 = por %p165, %p166
    %p168 = scmp.ne.s32.totalorder %s159, %s160
    %p169 = scmp.eq.s32.totalorder %s18, 0
    %p170 = por %p168, %p169
    %p171 = scmp.ne.s32.totalorder %s159, %s160
    %p172 = scmp.eq.s32.totalorder %s19, 1
    %p173 = por %p171, %p172
    %p175 = scmp.ne.s32.totalorder %s160, %s174
    %p176 = scmp.eq.s32.totalorder %s19, 0
    %p177 = por %p175, %p176
    %s178 = ssub.s32 %s13, %s20
    %p179 = scmp.eq.s32.totalorder %s178, 0
    %s181 = sadd.s32 %s180, 1
    %s182 = scalar_select %p179, %s180, %s181
    %p185 = pneg %p179
    %p186 = scmp.eq.s32.totalorder %s13, 1
    %p187 = por %p185, %p186
    %p188 = scmp.ne.s32.totalorder %s180, %s183
    %p189 = scmp.eq.s32.totalorder %s13, 0
    %p190 = por %p188, %p189
    %p191 = scmp.ne.s32.totalorder %s180, %s183
    %p192 = scmp.eq.s32.totalorder %s18, 1
    %p193 = por %p191, %p192
    %p194 = scmp.ne.s32.totalorder %s183, %s184
    %p195 = scmp.eq.s32.totalorder %s18, 0
    %p196 = por %p194, %p195
    %p197 = scmp.ne.s32.totalorder %s183, %s184
    %p198 = scmp.eq.s32.totalorder %s19, 1
    %p199 = por %p197, %p198
    %p201 = scmp.ne.s32.totalorder %s184, %s200
    %p202 = scmp.eq.s32.totalorder %s19, 0
    %p203 = por %p201, %p202
    %p204 = scmp.le.s32.totalorder 1, %s13
    %p205 = scmp.lt.s32.totalorder %s13, 3
    %p206 = pnand %p204, %p205
    %p207 = pneg %p206
    // Predicated region
    $region9: #{basic_block_forward.9} parent=5 // pred_check
      _
    $region10: #{basic_block_forward.9} parent=5 // pred_check_branch
      %209 = sbr.rel (%p206) target = $region12
    $region11: #{basic_block_forward.9} parent=5 // pred_region
      %s210 = ssub.s32 %s13, 1
      // Predicated region
      $region13: #{basic_block_forward.9} parent=11 // pred_check
        %p211 = pneg %p86
      $region14: #{basic_block_forward.9} parent=11 // pred_check_branch
        %213 = sbr.rel (%p211) target = $region16
      $region15: #{basic_block_forward.9} parent=11 // pred_region
        _
      $region16: #{basic_block_forward.9} parent=11 // pred_fallthru
        _
      // Predicated region
      $region17: #{basic_block_forward.9} parent=11 // pred_check
        %p214 = pneg %p107
      $region18: #{basic_block_forward.9} parent=11 // pred_check_branch
        %216 = sbr.rel (%p214) target = $region20
      $region19: #{basic_block_forward.9} parent=11 // pred_region
        _
      $region20: #{basic_block_forward.9} parent=11 // pred_fallthru
        _
      // Predicated region
      $region21: #{basic_block_forward.9} parent=11 // pred_check
        %p217 = pneg %p128
      $region22: #{basic_block_forward.9} parent=11 // pred_check_branch
        %219 = sbr.rel (%p217) target = $region24
      $region23: #{basic_block_forward.9} parent=11 // pred_region
        _
      $region24: #{basic_block_forward.9} parent=11 // pred_fallthru
        _
      // Predicated region
      $region25: #{basic_block_forward.9} parent=11 // pred_check
        %p220 = pneg %p149
      $region26: #{basic_block_forward.9} parent=11 // pred_check_branch
        %222 = sbr.rel (%p220) target = $region28
      $region27: #{basic_block_forward.9} parent=11 // pred_region
        _
      $region28: #{basic_block_forward.9} parent=11 // pred_fallthru
        _
      // Predicated region
      $region29: #{basic_block_forward.9} parent=11 // pred_check
        %p223 = pneg %p170
      $region30: #{basic_block_forward.9} parent=11 // pred_check_branch
        %225 = sbr.rel (%p223) target = $region32
      $region31: #{basic_block_forward.9} parent=11 // pred_region
        _
      $region32: #{basic_block_forward.9} parent=11 // pred_fallthru
        _
    $region12: #{basic_block_forward.9} parent=5 // pred_fallthru
      _
    %p226 = scmp.lt.s32.totalorder %s13, 2
    // Predicated region
    $region33: #{basic_block_forward.9} parent=5 // pred_check
      %p227 = pneg %p226
    $region34: #{basic_block_forward.9} parent=5 // pred_check_branch
      %229 = sbr.rel (%p227) target = $region36
    $region35: #{basic_block_forward.9} parent=5 // pred_region
      // Predicated region
      $region37: #{basic_block_forward.9} parent=35 // pred_check
        %p230 = pneg %p33
      $region38: #{basic_block_forward.9} parent=35 // pred_check_branch
        %232 = sbr.rel (%p230) target = $region40
      $region39: #{basic_block_forward.9} parent=35 // pred_region
        %s233 = smul.u32 8, %s13
        %p234 = scmp.lt.s32.totalorder %s233, 15
        %s235 = scalar_select %p234, %s233, 15
        %s236 = smul.addr %s235, 4
        %s237 = scalar_lea.vmem %s0, %s236
        %s238 = smul.u32 8, %s13
      $region40: #{basic_block_forward.9} parent=35 // pred_fallthru
        _
      // Predicated region
      $region41: #{basic_block_forward.9} parent=35 // pred_check
        %p239 = pneg %p59
      $region42: #{basic_block_forward.9} parent=35 // pred_check_branch
        %241 = sbr.rel (%p239) target = $region44
      $region43: #{basic_block_forward.9} parent=35 // pred_region
        %s242 = smul.u32 8, %s13
        %p243 = scmp.lt.s32.totalorder %s242, 15
        %s244 = scalar_select %p243, %s242, 15
        %s245 = smul.addr %s244, 4
        %s246 = scalar_lea.vmem %s1, %s245
        %s247 = smul.u32 8, %s13
      $region44: #{basic_block_forward.9} parent=35 // pred_fallthru
        _
    $region36: #{basic_block_forward.9} parent=5 // pred_fallthru
      _
    %p248 = scmp.le.s32.totalorder 1, %s13
    %p249 = scmp.lt.s32.totalorder %s13, 3
    %p250 = pnand %p248, %p249
    %p251 = pneg %p250
    // Predicated region
    $region45: #{basic_block_forward.9} parent=5 // pred_check
      _
    $region46: #{basic_block_forward.9} parent=5 // pred_check_branch
      %253 = sbr.rel (%p250) target = $region48
    $region47: #{basic_block_forward.9} parent=5 // pred_region
      %s254 = ssub.s32 %s13, 1
      %s255 = smul.u32 8, %s18
      %p256 = scmp.lt.s32.totalorder %s255, 15
      %s257 = scalar_select %p256, %s255, 15
      %s258 = smul.addr %s257, 4
      %s259 = scalar_lea.vmem %s0, %s258
      %p260 = pneg %p39
      %p261 = pneg %p36
      %s262 = smul.u32 8, %s18
      %p263 = scmp.lt.s32.totalorder %s262, 15
      %s264 = scalar_select %p263, %s262, 15
      %s265 = smul.addr %s264, 4
      %s266 = scalar_lea.vmem %s1, %s265
      %p267 = pneg %p65
      %p268 = pneg %p62
      %p269 = pneg %p86
      %p270 = pneg %p83
      %p271 = pneg %p107
      %p272 = pneg %p104
      %p273 = pneg %p128
      %p274 = pneg %p125
      %p275 = pneg %p149
      %p276 = pneg %p146
      %p277 = pneg %p170
      %p278 = pneg %p167
      %p279 = pneg %p196
      %p280 = pneg %p193
      %s281 = smul.u32 8, %s18
      %p282 = scmp.lt.s32.totalorder %s281, 15
      %s283 = scalar_select %p282, %s281, 15
      %s284 = smul.addr %s283, 8
      %s285 = scalar_lea.vmem %s7, %s284
      %s286 = smul.u32 8, %s18
      %p287 = scmp.lt.s32.totalorder %s286, 15
      %s288 = scalar_select %p287, %s286, 15
      %s289 = smul.addr %s288, 4
      %s290 = scalar_lea.vmem %s0, %s289
      %s291 = smul.u32 8, %s18
      %s292 = smul.u32 8, %s18
      %p293 = scmp.lt.s32.totalorder %s292, 15
      %s294 = scalar_select %p293, %s292, 15
      %s295 = smul.addr %s294, 4
      %s296 = scalar_lea.vmem %s1, %s295
      %s297 = smul.u32 8, %s18
      %s298 = smul.u32 8, %s18
      %p299 = scmp.lt.s32.totalorder %s298, 15
      %s300 = scalar_select %p299, %s298, 15
      %s301 = smul.addr %s300, 8
      %s302 = scalar_lea.vmem %s7, %s301
      %s303 = smul.u32 8, %s18
      %v305 = vld [vmem:[%s290] sm:$0xf]
      %v306 = vld [vmem:[%s290 + $0x4] sm:$0xf]
      %v307 = vld [vmem:[%s290 + $0x8] sm:$0xf]
      %v308 = vld [vmem:[%s290 + $0xc] sm:$0xf]
      %v309 = vld [vmem:[%s290 + $0x10] sm:$0xf]
      %v310 = vld [vmem:[%s290 + $0x14] sm:$0xf]
      %v311 = vld [vmem:[%s290 + $0x18] sm:$0xf]
      %v312 = vld [vmem:[%s290 + $0x1c] sm:$0xf]
      %v313 = vunpack.c.l.bf16 %v305
      %v314 = vunpack.c.l.bf16 %v306
      %v315 = vunpack.c.l.bf16 %v307
      %v316 = vunpack.c.l.bf16 %v308
      %v317 = vunpack.c.l.bf16 %v309
      %v318 = vunpack.c.l.bf16 %v310
      %v319 = vunpack.c.l.bf16 %v311
      %v320 = vunpack.c.l.bf16 %v312
      %v321 = vld [vmem:[%s3] sm:$0x1]
      %v323 = vlaneseq
      %v324 = vshrl.u32 %v323, 7
      %v325 = vsub.s32 0, %v324
      %v326 = vrot.slane %v321, %v325
      %v328 = vmul.f32 %v313, %v326
      %v329 = vmul.f32 %v314, %v326
      %v330 = vmul.f32 %v315, %v326
      %v331 = vmul.f32 %v316, %v326
      %v332 = vmul.f32 %v317, %v326
      %v333 = vmul.f32 %v318, %v326
      %v334 = vmul.f32 %v319, %v326
      %v335 = vmul.f32 %v320, %v326
      %v336 = vld [vmem:[%s4] sm:$0x1]
      %v338 = vlaneseq
      %v339 = vshrl.u32 %v338, 7
      %v340 = vsub.s32 0, %v339
      %v341 = vrot.slane %v336, %v340
      %v343 = vadd.f32 %v328, %v341
      %v344 = vadd.f32 %v329, %v341
      %v345 = vadd.f32 %v330, %v341
      %v346 = vadd.f32 %v331, %v341
      %v347 = vadd.f32 %v332, %v341
      %v348 = vadd.f32 %v333, %v341
      %v349 = vadd.f32 %v334, %v341
      %v350 = vadd.f32 %v335, %v341
      %v351 = vld [vmem:[%s296] sm:$0xf]
      %v352 = vld [vmem:[%s296 + $0x4] sm:$0xf]
      %v353 = vld [vmem:[%s296 + $0x8] sm:$0xf]
      %v354 = vld [vmem:[%s296 + $0xc] sm:$0xf]
      %v355 = vld [vmem:[%s296 + $0x10] sm:$0xf]
      %v356 = vld [vmem:[%s296 + $0x14] sm:$0xf]
      %v357 = vld [vmem:[%s296 + $0x18] sm:$0xf]
      %v358 = vld [vmem:[%s296 + $0x1c] sm:$0xf]
      %v359 = vld [vmem:[%s2] sm:$0xf]
      %v360 = vld [vmem:[%s2 + $0x4] sm:$0xf]
      %v361 = vld [vmem:[%s2 + $0x8] sm:$0xf]
      %v362 = vld [vmem:[%s2 + $0xc] sm:$0xf]
      %v363 = vld [vmem:[%s2 + $0x10] sm:$0xf]
      %v364 = vld [vmem:[%s2 + $0x14] sm:$0xf]
      %v365 = vld [vmem:[%s2 + $0x18] sm:$0xf]
      %v366 = vld [vmem:[%s2 + $0x1c] sm:$0xf]
      %v367 = vld [vmem:[%s2 + $0x20] sm:$0xf]
      %v368 = vld [vmem:[%s2 + $0x24] sm:$0xf]
      %v369 = vld [vmem:[%s2 + $0x28] sm:$0xf]
      %v370 = vld [vmem:[%s2 + $0x2c] sm:$0xf]
      %v371 = vld [vmem:[%s2 + $0x30] sm:$0xf]
      %v372 = vld [vmem:[%s2 + $0x34] sm:$0xf]
      %v373 = vld [vmem:[%s2 + $0x38] sm:$0xf]
      %v374 = vld [vmem:[%s2 + $0x3c] sm:$0xf]
      %v383 = vunpack.c.l.b16 %v351
      %v384 = vunpack.c.l.b16 %v352
      %v385 = vunpack.c.l.b16 %v353
      %v386 = vunpack.c.l.b16 %v354
      %v387 = vunpack.c.l.b16 %v355
      %v388 = vunpack.c.l.b16 %v356
      %v389 = vunpack.c.l.b16 %v357
      %v390 = vunpack.c.l.b16 %v358
      %v391 = vpack.c.b16 %v384, %v383
      %v392 = vpack.c.b16 %v386, %v385
      %v393 = vpack.c.b16 %v388, %v387
      %v394 = vpack.c.b16 %v390, %v389
      %v415 = vunpack.c.l.b16 %v359
      %v416 = vunpack.c.l.b16 %v360
      %v417 = vunpack.c.l.b16 %v361
      %v418 = vunpack.c.l.b16 %v362
      %v419 = vunpack.c.l.b16 %v363
      %v420 = vunpack.c.l.b16 %v364
      %v421 = vunpack.c.l.b16 %v365
      %v422 = vunpack.c.l.b16 %v366
      %v423 = vunpack.c.l.b16 %v367
      %v424 = vunpack.c.l.b16 %v368
      %v425 = vunpack.c.l.b16 %v369
      %v426 = vunpack.c.l.b16 %v370
      %v427 = vunpack.c.l.b16 %v371
      %v428 = vunpack.c.l.b16 %v372
      %v429 = vunpack.c.l.b16 %v373
      %v430 = vunpack.c.l.b16 %v374
      %v431 = vpack.c.b16 %v416, %v415
      %v432 = vpack.c.b16 %v418, %v417
      %v433 = vpack.c.b16 %v420, %v419
      %v434 = vpack.c.b16 %v422, %v421
      %v435 = vpack.c.b16 %v424, %v423
      %v436 = vpack.c.b16 %v426, %v425
      %v437 = vpack.c.b16 %v428, %v427
      %v438 = vpack.c.b16 %v430, %v429
      %447 = vmatprep.subr.bf16.mxu0 0
      %448 = vmatpush1.bf16.msra.mxu0 %v438
      %449 = vmatprep.subr.bf16.mxu0 0
      %450 = vmatpush1.bf16.msra.mxu0 %v437
      %451 = vmatprep.subr.bf16.mxu0 0
      %452 = vmatpush1.bf16.msra.mxu0 %v436
      %453 = vmatprep.subr.bf16.mxu0 0
      %454 = vmatpush1.bf16.msra.mxu0 %v435
      %455 = vmatprep.subr.bf16.mxu0 0
      %456 = vmatpush1.bf16.msra.mxu0 %v434
      %457 = vmatprep.subr.bf16.mxu0 0
      %458 = vmatpush1.bf16.msra.mxu0 %v433
      %459 = vmatprep.subr.bf16.mxu0 0
      %460 = vmatpush1.bf16.msra.mxu0 %v432
      %461 = vmatprep.subr.bf16.mxu0 0
      %462 = vmatpush1.bf16.msra.mxu0 %v431
      %463 = vmatprep.subr.bf16.mxu0 0
      %464 = vmatpush2.bf16.msra.mxu0 0
      %465 = vmatprep.subr.bf16.mxu0 0
      %466 = vmatpush2.bf16.msra.mxu0 0
      %467 = vmatprep.subr.bf16.mxu0 0
      %468 = vmatpush2.bf16.msra.mxu0 0
      %469 = vmatprep.subr.bf16.mxu0 0
      %470 = vmatpush2.bf16.msra.mxu0 0
      %471 = vmatprep.subr.bf16.mxu0 0
      %472 = vmatpush2.bf16.msra.mxu0 0
      %473 = vmatprep.subr.bf16.mxu0 0
      %474 = vmatpush2.bf16.msra.mxu0 0
      %475 = vmatprep.subr.bf16.mxu0 0
      %476 = vmatpush2.bf16.msra.mxu0 0
      %477 = vmatprep.subr.bf16.mxu0 0
      %478 = vmatpush2.bf16.msra.mxu0 0
      %479 = vmatprep.mubr.bf16.mxu0 0
      %480 = vmatmul.mubr.bf16.gmra.mxu0 %v391
      %v481 = vpop.f32.mrf.mxu0
      %v482 = vadd.f32 0.0, %v481
      %v483 = vpop.f32.mrf.mxu0
      %v484 = vpop.f32.mrf.mxu0
      %v485 = vadd.f32 0.0, %v484
      %v486 = vpop.f32.mrf.mxu0
      %487 = vmatprep.mubr.bf16.mxu0 0
      %488 = vmatmul.mubr.bf16.gmra.mxu0 %v392
      %v489 = vpop.f32.mrf.mxu0
      %v490 = vadd.f32 0.0, %v489
      %v491 = vpop.f32.mrf.mxu0
      %v492 = vpop.f32.mrf.mxu0
      %v493 = vadd.f32 0.0, %v492
      %v494 = vpop.f32.mrf.mxu0
      %495 = vmatprep.mubr.bf16.mxu0 0
      %496 = vmatmul.mubr.bf16.gmra.mxu0 %v393
      %v497 = vpop.f32.mrf.mxu0
      %v498 = vadd.f32 0.0, %v497
      %v499 = vpop.f32.mrf.mxu0
      %v500 = vpop.f32.mrf.mxu0
      %v501 = vadd.f32 0.0, %v500
      %v502 = vpop.f32.mrf.mxu0
      %503 = vmatprep.mubr.bf16.mxu0 0
      %504 = vmatmul.mubr.bf16.gmra.mxu0 %v394
      %v505 = vpop.f32.mrf.mxu0
      %v506 = vadd.f32 0.0, %v505
      %v507 = vpop.f32.mrf.mxu0
      %v508 = vpop.f32.mrf.mxu0
      %v509 = vadd.f32 0.0, %v508
      %v510 = vpop.f32.mrf.mxu0
      %511 = vdwg.mxu0
      %v512 = vld [vmem:[%s5] sm:$0x1]
      %v514 = vlaneseq
      %v515 = vshrl.u32 %v514, 7
      %v516 = vsub.s32 0, %v515
      %v517 = vrot.slane %v512, %v516
      %v519 = vmul.f32 %v482, %v517
      %v520 = vmul.f32 %v485, %v517
      %v521 = vmul.f32 %v490, %v517
      %v522 = vmul.f32 %v493, %v517
      %v523 = vmul.f32 %v498, %v517
      %v524 = vmul.f32 %v501, %v517
      %v525 = vmul.f32 %v506, %v517
      %v526 = vmul.f32 %v509, %v517
      %v527 = vadd.f32 %v343, %v519
      %v528 = vadd.f32 %v344, %v520
      %v529 = vadd.f32 %v345, %v521
      %v530 = vadd.f32 %v346, %v522
      %v531 = vadd.f32 %v347, %v523
      %v532 = vadd.f32 %v348, %v524
      %v533 = vadd.f32 %v349, %v525
      %v534 = vadd.f32 %v350, %v526
      %v535 = vld [vmem:[%s6] sm:$0x1]
      %v537 = vlaneseq
      %v538 = vshrl.u32 %v537, 7
      %v539 = vsub.s32 0, %v538
      %v540 = vrot.slane %v535, %v539
      %v542 = vadd.f32 %v527, %v540
      %v543 = vadd.f32 %v528, %v540
      %v544 = vadd.f32 %v529, %v540
      %v545 = vadd.f32 %v530, %v540
      %v546 = vadd.f32 %v531, %v540
      %v547 = vadd.f32 %v532, %v540
      %v548 = vadd.f32 %v533, %v540
      %v549 = vadd.f32 %v534, %v540
      %v550 = vmax.f32 %v542, 0.0
      %v551 = vmax.f32 %v543, 0.0
      %v552 = vmax.f32 %v544, 0.0
      %v553 = vmax.f32 %v545, 0.0
      %v554 = vmax.f32 %v546, 0.0
      %v555 = vmax.f32 %v547, 0.0
      %v556 = vmax.f32 %v548, 0.0
      %v557 = vmax.f32 %v549, 0.0
      %558 = vst [vmem:[%s302] sm:$0xff] %v550
      %559 = vst [vmem:[%s302 + $0x8] sm:$0xff] %v551
      %560 = vst [vmem:[%s302 + $0x10] sm:$0xff] %v552
      %561 = vst [vmem:[%s302 + $0x18] sm:$0xff] %v553
      %562 = vst [vmem:[%s302 + $0x20] sm:$0xff] %v554
      %563 = vst [vmem:[%s302 + $0x28] sm:$0xff] %v555
      %564 = vst [vmem:[%s302 + $0x30] sm:$0xff] %v556
      %565 = vst [vmem:[%s302 + $0x38] sm:$0xff] %v557
      %s566 = smul.u32 8, %s18
      %p567 = scmp.lt.s32.totalorder %s566, 15
      %s568 = scalar_select %p567, %s566, 15
      %s569 = smul.addr %s568, 8
      %s570 = scalar_lea.vmem %s7, %s569
      // Predicated region
      $region49: #{basic_block_forward.9} parent=47 // pred_check
        %p571 = pneg %p193
      $region50: #{basic_block_forward.9} parent=47 // pred_check_branch
        %573 = sbr.rel (%p571) target = $region52
      $region51: #{basic_block_forward.9} parent=47 // pred_region
        %s574 = smul.u32 8, %s18
      $region52: #{basic_block_forward.9} parent=47 // pred_fallthru
        _
    $region48: #{basic_block_forward.9} parent=5 // pred_fallthru
      _
    %p575 = scmp.le.s32.totalorder 2, %s13
    // Predicated region
    $region53: #{basic_block_forward.9} parent=5 // pred_check
      %p576 = pneg %p575
    $region54: #{basic_block_forward.9} parent=5 // pred_check_branch
      %578 = sbr.rel (%p576) target = $region56
    $region55: #{basic_block_forward.9} parent=5 // pred_region
      %s579 = ssub.s32 %s13, 2
      // Predicated region
      $region57: #{basic_block_forward.9} parent=55 // pred_check
        %p580 = pneg %p199
      $region58: #{basic_block_forward.9} parent=55 // pred_check_branch
        %582 = sbr.rel (%p580) target = $region60
      $region59: #{basic_block_forward.9} parent=55 // pred_region
        %s583 = smul.u32 8, %s19
        %p584 = scmp.lt.s32.totalorder %s583, 15
        %s585 = scalar_select %p584, %s583, 15
        %s586 = smul.addr %s585, 8
        %s587 = scalar_lea.vmem %s7, %s586
      $region60: #{basic_block_forward.9} parent=55 // pred_fallthru
        _
    $region56: #{basic_block_forward.9} parent=5 // pred_fallthru
      _
  $region6: #{basic_block_forward.9} parent=0 // loop_footer
    %s17 = sadd.s32 1, %s13
  $region7: #{basic_block_forward.9} parent=0 // loop_footer_branch
    %12 = sbr.rel target = $region3
  $region8: #{basic_block_forward.9} parent=0 // loop_exit
    _

</llo_original>
